<compile_context>
chip_gen: v5e
topology: v5e:2x2
jax: 0.10.0
libtpu: 0.0.40
codegen_flags: <defaults>
</compile_context>

<pallas_src>
import functools

import jax
import jax.numpy as jnp
from jax import lax
from jax.experimental import pallas as pl
from jax.experimental.pallas import tpu as pltpu


def _round_up(x, m):
    return ((x + m - 1) // m) * m


# Sticky flag: if single-buffered resident specs are rejected once, stop retrying.
_SINGLE_BUFFER_OK = [True]


def _resident_spec(shape, single_buffer):
    """Whole-array resident operand; single-buffered when supported."""
    index_map = lambda i: (0,) * len(shape)
    if single_buffer:
        try:
            return pl.BlockSpec(shape, index_map, pipeline_mode=pl.Buffered(1))
        except (AttributeError, TypeError):
            pass
    return pl.BlockSpec(shape, index_map)


def _plan_tiling(n, e_dim, k, max_tile_n, k_block_req, mm_bytes, gather_bytes):
    """Pick (tile_n, k_blk, k_pad, vmem_limit) from a VMEM budget that counts the
    resident codebook copies, streamed tiles (incl. lane-padded idx) and the
    (tile_n, k_blk) f32 intermediates, branched on the chip's VMEM capacity."""
    try:
        vmem_cap = int(pltpu.get_tpu_info().vmem_capacity_bytes)
    except Exception:
        vmem_cap = 64 * 1024 * 1024            # conservative: v7x per-TC VMEM
    vmem_limit = min((vmem_cap * 3) // 4, 96 * 1024 * 1024)
    margin = 2 * 1024 * 1024

    n_up = _round_up(max(n, 1), 128)
    k128 = _round_up(max(k, 1), 128)
    kblk_top = min(_round_up(min(k_block_req or 2048, k128), 128), k128)

    tiles = [t for t in (max_tile_n, 2048, 1024, 512, 256, 128)
             if isinstance(t, int) and t % 128 == 0 and 128 <= t <= max_tile_n]
    tiles = sorted({min(t, n_up) for t in tiles}, reverse=True) or [128]
    kblks = [kb for kb in sorted({kblk_top, 1024, 512, 256, 128}, reverse=True)
             if kb <= kblk_top]

    def fits(t, kb, kp):
        # resident operands (requested single-buffered via pl.Buffered(1))
        resident = kp * e_dim * mm_bytes + kp * e_dim * gather_bytes + kp * 4
        # streamed tiles, double-buffered: x in, q out, lane-padded idx, sse
        stream = 2 * (t * e_dim * 4) * 2 + 2 * (t * 128 * 4) + 2 * (8 * 128 * 4)
        # in-kernel intermediates: xe, d, iota, onehot + online-argmin carries
        interm = 4 * t * kb * 4 + t * (e_dim + 2) * 4
        return resident + stream + interm + margin <= vmem_limit

    for t in tiles:                      # prefer large row tiles (per-step amortization)
        for kb in kblks:                 # then the largest K block that still fits
            kp = _round_up(k, kb)
            if fits(t, kb, kp):
                return t, kb, kp, vmem_limit
    return 128, 128, _round_up(k, 128), vmem_limit


def _vq_kernel(x_ref, e_ref, et_ref, e2_ref, q_ref, idx_ref, sse_ref, *,
               tile_n, n_valid, kblk, k_blocks):
    x = x_ref[...]                                    # (TILE_N, E) f32
    x_mm = x.astype(e_ref.dtype)                      # bf16 only if opted in

    if k_blocks == 1:
        # Single pass: distances up to the per-row constant ||x||^2 (argmin-invariant).
        xe = jnp.dot(x_mm, e_ref[...], preferred_element_type=jnp.float32)
        d = e2_ref[...] - 2.0 * xe                    # (TILE_N, K_PAD)
        iota = lax.broadcasted_iota(jnp.int32, (tile_n, kblk), 1)
        dmin = jnp.min(d, axis=1, keepdims=True)
        # first-occurrence tie-break (torch.argmin semantics); min+where+min lowers on Mosaic
        idx = jnp.min(jnp.where(d == dmin, iota, kblk),
                      axis=1, keepdims=True).astype(jnp.int32)
        onehot = (iota == idx).astype(et_ref.dtype)
        q = jnp.dot(onehot, et_ref[...], preferred_element_type=jnp.float32)
    else:
        # K-blocked online argmin: intermediates capped at (TILE_N, K_BLK).
        e_dim = q_ref.shape[1]

        def body(kb, carry):
            m, am, best = carry
            off = kb * kblk
            k0 = pl.multiple_of(off, kblk)
            xe = jnp.dot(x_mm, e_ref[:, pl.ds(k0, kblk)],
                         preferred_element_type=jnp.float32)
            d = e2_ref[:, pl.ds(k0, kblk)] - 2.0 * xe
            iota = lax.broadcasted_iota(jnp.int32, (tile_n, kblk), 1)
            dmin = jnp.min(d, axis=1, keepdims=True)
            lidx = jnp.min(jnp.where(d == dmin, iota, kblk),
                           axis=1, keepdims=True).astype(jnp.int32)
            onehot = (iota == lidx).astype(et_ref.dtype)
            lbest = jnp.dot(onehot, et_ref[pl.ds(k0, kblk), :],
                            preferred_element_type=jnp.float32)
            upd = dmin < m                            # strict <: first-occurrence across blocks
            return (jnp.where(upd, dmin, m),
                    jnp.where(upd, lidx + off, am),
                    jnp.where(upd, lbest, best))

        init = (jnp.full((tile_n, 1), jnp.finfo(jnp.float32).max, jnp.float32),
                jnp.zeros((tile_n, 1), jnp.int32),
                jnp.zeros((tile_n, e_dim), jnp.float32))
        _, idx, q = lax.fori_loop(0, k_blocks, body, init)

    idx_ref[...] = idx
    q_ref[...] = q.astype(q_ref.dtype)

    # per-block partial SSE, masked so zero-padded rows contribute nothing
    row = pl.program_id(0) * tile_n + lax.broadcasted_iota(jnp.int32, (tile_n, 1), 0)
    diff = jnp.where(row < n_valid, x - q, 0.0)
    sse_ref[...] = jnp.full(sse_ref.shape, jnp.sum(diff * diff), jnp.float32)


def vector_quantizer_forward(x, e_i_ts, *, max_tile_n=2048, k_block=None,
                             bf16_distance_matmul=False, bf16_gather_matmul=False):
    """Forward pass matching VectorQuantizer.forward.

    bf16_distance_matmul: run the distance matmul with bf16 inputs / f32 accumulation
      (full-rate MXU on v5e/v6e/v7x, ~3x the emulated-f32 path).  Recommended for
      throughput (perf review); only near-tie argmin choices can differ from f32.
    bf16_gather_matmul: run the one-hot gather in bf16 (quantized values become
      bf16-rounded codebook rows).  Off by default for exactness.
    """
    B, L, E = x.shape
    assert e_i_ts.shape[0] == E
    K = e_i_ts.shape[1]
    N = B * L

    mm_bytes = 2 if bf16_distance_matmul else 4
    gather_bytes = 2 if bf16_gather_matmul else 4
    tile_n, kblk, k_pad, vmem_limit = _plan_tiling(
        N, E, K, max_tile_n, k_block, mm_bytes, gather_bytes)
    k_blocks = k_pad // kblk
    n_pad = _round_up(N, tile_n)
    num_blocks = n_pad // tile_n

    # ---- operand prep (hoisted out of the kernel) ----
    flat_x = x.reshape(N, E).astype(jnp.float32)
    if n_pad != N:
        flat_x = jnp.pad(flat_x, ((0, n_pad - N), (0, 0)))

    e_f32 = e_i_ts.astype(jnp.float32)
    if k_pad != K:
        e_f32 = jnp.pad(e_f32, ((0, 0), (0, k_pad - K)))
    e2 = jnp.sum(e_f32 * e_f32, axis=0, keepdims=True)          # (1, K_PAD), hoisted ||e||^2
    if k_pad != K:
        # padded codebook columns must never win the argmin
        e2 = jnp.where(jnp.arange(k_pad)[None, :] < K, e2, jnp.float32(1e30))
    e_mm = e_f32.astype(jnp.bfloat16) if bf16_distance_matmul else e_f32   # (E, K_PAD)
    e_t = e_f32.T.astype(jnp.bfloat16) if bf16_gather_matmul else e_f32.T  # (K_PAD, E)

    kernel = functools.partial(_vq_kernel, tile_n=tile_n, n_valid=N,
                               kblk=kblk, k_blocks=k_blocks)

    cost = pl.CostEstimate(
        flops=int(4 * n_pad * k_pad * E),                        # distance + gather matmuls
        transcendentals=0,
        bytes_accessed=int(2 * n_pad * E * 4 + n_pad * 4
                           + k_pad * E * (mm_bytes + gather_bytes) + k_pad * 4),
    )

    def _run(single_buffer):
        return pl.pallas_call(
            kernel,
            grid=(num_blocks,),
            out_shape=(
                jax.ShapeDtypeStruct((n_pad, E), jnp.float32),
                jax.ShapeDtypeStruct((n_pad, 1), jnp.int32),
                jax.ShapeDtypeStruct((num_blocks, 1, 1), jnp.float32),
            ),
            in_specs=[
                pl.BlockSpec((tile_n, E), lambda i: (i, 0)),      # streamed x tile
                _resident_spec((E, k_pad), single_buffer),        # resident codebook
                _resident_spec((k_pad, E), single_buffer),        # resident codebook^T
                _resident_spec((1, k_pad), single_buffer),        # resident ||e||^2
            ],
            out_specs=(
                pl.BlockSpec((tile_n, E), lambda i: (i, 0)),      # quantized tile
                pl.BlockSpec((tile_n, 1), lambda i: (i, 0)),      # indices
                pl.BlockSpec((1, 1, 1), lambda i: (i, 0, 0)),     # per-block partial SSE
            ),
            compiler_params=pltpu.CompilerParams(
                dimension_semantics=("parallel",),   # row tiles are independent
                vmem_limit_bytes=int(vmem_limit),    # 48 MiB on v7x, up to 96 MiB on v5e/v6e
            ),
            cost_estimate=cost,
        )(flat_x, e_mm, e_t, e2)

    if _SINGLE_BUFFER_OK[0]:
        try:
            q_flat, idx_col, sse_part = _run(True)
        except Exception:
            _SINGLE_BUFFER_OK[0] = False
            q_flat, idx_col, sse_part = _run(False)
    else:
        q_flat, idx_col, sse_part = _run(False)

    quantized_x = q_flat[:N].reshape(B, L, E)
    encoding_indices = idx_col[:N, 0].reshape(B, L)

    mse = jnp.sum(sse_part) / jnp.float32(N * E)
    # Forward values of both losses equal mse (detach() does not change values).
    # TODO(synk): gradient routing of detach() (codebook vs encoder split) is not
    # reproduced — this is a forward-only kernel without a custom VJP.
    dictionary_loss = mse
    commitment_loss = mse

    # straight-through estimator (value-identical to quantized_x in the forward pass)
    xf = x.astype(jnp.float32)
    quantized_x_st = xf + lax.stop_gradient(quantized_x - xf)

    return quantized_x_st, dictionary_loss, commitment_loss, encoding_indices


def _check(x, e_i_ts, outs, dist_rtol):
    """Robust functional checks against the PyTorch forward math (tolerant of
    near-tie argmin rounding so both the f32 and bf16 paths can be validated)."""
    qx, dl, cl, idx = outs
    B, L, E = x.shape
    K = e_i_ts.shape[1]

    assert idx.shape == (B, L) and idx.dtype == jnp.int32
    idx_f = idx.reshape(-1)
    assert bool(jnp.all((idx_f >= 0) & (idx_f < K)))

    flat_x = x.reshape(-1, E).astype(jnp.float32)
    e = e_i_ts.astype(jnp.float32)
    d = (jnp.sum(flat_x ** 2, axis=1, keepdims=True)
         - 2.0 * flat_x @ e + jnp.sum(e ** 2, axis=0, keepdims=True))
    d_sel = jnp.take_along_axis(d, idx_f[:, None], axis=1)[:, 0]
    tol = 1e-4 + dist_rtol * jnp.max(jnp.abs(d), axis=1)
    assert bool(jnp.all(d_sel <= jnp.min(d, axis=1) + tol))      # idx attains the min distance

    q_expect = e.T[idx_f].reshape(B, L, E)                       # exact codebook rows at idx
    assert bool(jnp.allclose(qx, q_expect, atol=1e-5, rtol=1e-5))

    mse = jnp.mean((x.astype(jnp.float32) - qx) ** 2)
    assert bool(jnp.allclose(dl, mse, rtol=1e-4, atol=1e-5))
    assert bool(jnp.allclose(cl, mse, rtol=1e-4, atol=1e-5))


if __name__ == "__main__":
    embedding_dim = 32
    num_embeddings = 128
    B, L = 2, 8

    key = jax.random.PRNGKey(0)
    kx, ke, kx2, ke3, kx3 = jax.random.split(key, 5)
    limit = 3.0 ** 0.5
    e_i_ts = jax.random.uniform(ke, (embedding_dim, num_embeddings),
                                dtype=jnp.float32, minval=-limit, maxval=limit)
    x = jax.random.normal(kx, (B, L, embedding_dim), dtype=jnp.float32)

    # 1) default exact f32 path, single grid block
    outs = vector_quantizer_forward(x, e_i_ts)
    jax.block_until_ready(outs)
    _check(x, e_i_ts, outs, dist_rtol=1e-5)

    # 2) multi-block grid, row padding and masked partial-SSE path
    x2 = jax.random.normal(kx2, (2, 200, embedding_dim), dtype=jnp.float32)
    outs2 = vector_quantizer_forward(x2, e_i_ts, max_tile_n=128)
    jax.block_until_ready(outs2)
    _check(x2, e_i_ts, outs2, dist_rtol=1e-5)

    # 3) K-blocked online argmin + bf16 distance matmul (perf-review fast path)
    K3 = 320
    e3 = jax.random.uniform(ke3, (embedding_dim, K3),
                            dtype=jnp.float32, minval=-limit, maxval=limit)
    x3 = jax.random.normal(kx3, (B, L, embedding_dim), dtype=jnp.float32)
    outs3 = vector_quantizer_forward(x3, e3, k_block=128, bf16_distance_matmul=True)
    jax.block_until_ready(outs3)
    _check(x3, e3, outs3, dist_rtol=2e-2)

    print("KERNEL_OK")
</pallas_src>

<mosaic_0001>
module attributes {stable_mosaic.version = 11 : i64} {
  func.func @_vq_kernel(%arg0: i32, %arg1: memref<128x32xf32, #tpu.memory_space<vmem>>, %arg2: memref<32x128xf32, #tpu.memory_space<vmem>>, %arg3: memref<128x32xf32, #tpu.memory_space<vmem>>, %arg4: memref<1x128xf32, #tpu.memory_space<vmem>>, %arg5: memref<128x32xf32, #tpu.memory_space<vmem>>, %arg6: memref<128x1xi32, #tpu.memory_space<vmem>>, %arg7: memref<1x1x1xf32, #tpu.memory_space<vmem>>) attributes {dimension_semantics = [#tpu.dimension_semantics<parallel>], iteration_bounds = array<i64: 1>, scalar_prefetch = 0 : i64, scratch_operands = 0 : i64, tpu.core_type = #tpu.core_type<tc>, window_params = [{transform_indices = @transform_0, window_bounds = array<i64: 128, 32>}, {pipeline_mode = #tpu.pipeline_mode<synchronous>, transform_indices = @transform_1, window_bounds = array<i64: 32, 128>}, {pipeline_mode = #tpu.pipeline_mode<synchronous>, transform_indices = @transform_2, window_bounds = array<i64: 128, 32>}, {pipeline_mode = #tpu.pipeline_mode<synchronous>, transform_indices = @transform_3, window_bounds = array<i64: 1, 128>}, {transform_indices = @transform_4, window_bounds = array<i64: 128, 32>}, {transform_indices = @transform_5, window_bounds = array<i64: 128, 1>}, {transform_indices = @transform_6, window_bounds = array<i64: 1, 1, 1>}]} {
    %c0 = arith.constant 0 : index
    %c0_0 = arith.constant 0 : index
    %0 = vector.load %arg1[%c0, %c0_0] : memref<128x32xf32, #tpu.memory_space<vmem>>, vector<128x32xf32>
    %c0_1 = arith.constant 0 : index
    %c0_2 = arith.constant 0 : index
    %1 = vector.load %arg2[%c0_1, %c0_2] : memref<32x128xf32, #tpu.memory_space<vmem>>, vector<32x128xf32>
    %cst = arith.constant dense<0.000000e+00> : vector<128x128xf32>
    %2 = tpu.matmul %0, %1, %cst {dimension_numbers = #tpu.dot_dimension_numbers<[1], [0], [0], [1], [0, 0, 1, 1], [], []>} : vector<128x32xf32>, vector<32x128xf32>, vector<128x128xf32> -> vector<128x128xf32>
    %c0_3 = arith.constant 0 : index
    %c0_4 = arith.constant 0 : index
    %3 = vector.load %arg4[%c0_3, %c0_4] : memref<1x128xf32, #tpu.memory_space<vmem>>, vector<1x128xf32>
    %cst_5 = arith.constant 2.000000e+00 : f32
    %4 = vector.broadcast %cst_5 : f32 to vector<128x128xf32>
    %5 = arith.mulf %4, %2 : vector<128x128xf32>
    %6 = vector.broadcast %3 : vector<1x128xf32> to vector<128x128xf32>
    %7 = arith.subf %6, %5 : vector<128x128xf32>
    %8 = tpu.iota {dimensions = array<i32: 1>} : vector<128x128xi32>
    %cst_6 = arith.constant dense<0x7F800000> : vector<128xf32>
    %9 = vector.multi_reduction <minimumf>, %7, %cst_6 [1] : vector<128x128xf32> to vector<128xf32>
    %10 = vector.shape_cast %9 : vector<128xf32> to vector<128x1xf32>
    %11 = vector.broadcast %10 : vector<128x1xf32> to vector<128x128xf32>
    %12 = arith.cmpf oeq, %7, %11 : vector<128x128xf32>
    %c128_i32 = arith.constant 128 : i32
    %13 = vector.broadcast %c128_i32 : i32 to vector<128x128xi32>
    %14 = arith.select %12, %8, %13 : vector<128x128xi1>, vector<128x128xi32>
    %cst_7 = arith.constant dense<2147483647> : vector<128xi32>
    %15 = vector.multi_reduction <minsi>, %14, %cst_7 [1] : vector<128x128xi32> to vector<128xi32>
    %16 = vector.shape_cast %15 : vector<128xi32> to vector<128x1xi32>
    %17 = vector.broadcast %16 : vector<128x1xi32> to vector<128x128xi32>
    %18 = arith.cmpi eq, %8, %17 : vector<128x128xi32>
    %19 = arith.extui %18 : vector<128x128xi1> to vector<128x128xi32>
    %20 = arith.sitofp %19 : vector<128x128xi32> to vector<128x128xf32>
    %c0_8 = arith.constant 0 : index
    %c0_9 = arith.constant 0 : index
    %21 = vector.load %arg3[%c0_8, %c0_9] : memref<128x32xf32, #tpu.memory_space<vmem>>, vector<128x32xf32>
    %cst_10 = arith.constant dense<0.000000e+00> : vector<128x32xf32>
    %22 = tpu.matmul %20, %21, %cst_10 {dimension_numbers = #tpu.dot_dimension_numbers<[1], [0], [0], [1], [0, 0, 1, 1], [], []>} : vector<128x128xf32>, vector<128x32xf32>, vector<128x32xf32> -> vector<128x32xf32>
    %c0_11 = arith.constant 0 : index
    %c0_12 = arith.constant 0 : index
    %23 = vector.load %arg6[%c0_11, %c0_12] : memref<128x1xi32, #tpu.memory_space<vmem>>, vector<128x1xi32>
    tpu.vector_store %arg6[%c0_11, %c0_12], %16 {strides = array<i32>} : memref<128x1xi32, #tpu.memory_space<vmem>>, vector<128x1xi32>,
    %c0_13 = arith.constant 0 : index
    %c0_14 = arith.constant 0 : index
    %24 = vector.load %arg5[%c0_13, %c0_14] : memref<128x32xf32, #tpu.memory_space<vmem>>, vector<128x32xf32>
    tpu.vector_store %arg5[%c0_13, %c0_14], %22 {strides = array<i32>} : memref<128x32xf32, #tpu.memory_space<vmem>>, vector<128x32xf32>,
    %c128_i32_15 = arith.constant 128 : i32
    %25 = arith.muli %arg0, %c128_i32_15 : i32
    %26 = tpu.iota {dimensions = array<i32: 0>} : vector<128x1xi32>
    %27 = vector.broadcast %25 : i32 to vector<128x1xi32>
    %28 = arith.addi %27, %26 : vector<128x1xi32>
    %c16_i32 = arith.constant 16 : i32
    %29 = vector.broadcast %c16_i32 : i32 to vector<128x1xi32>
    %30 = arith.cmpi slt, %28, %29 : vector<128x1xi32>
    %31 = arith.subf %0, %22 : vector<128x32xf32>
    %cst_16 = arith.constant 0.000000e+00 : f32
    %32 = vector.shape_cast %30 : vector<128x1xi1> to vector<128x1xi1>
    %33 = vector.broadcast %32 : vector<128x1xi1> to vector<128x32xi1>
    %34 = vector.broadcast %cst_16 : f32 to vector<128x32xf32>
    %35 = arith.select %33, %31, %34 : vector<128x32xi1>, vector<128x32xf32>
    %36 = arith.mulf %35, %35 : vector<128x32xf32>
    %37 = vector.shape_cast %36 : vector<128x32xf32> to vector<1x128x32xf32>
    %cst_17 = arith.constant dense<0.000000e+00> : vector<1xf32>
    %38 = vector.multi_reduction <add>, %37, %cst_17 [1, 2] : vector<1x128x32xf32> to vector<1xf32>
    %39 = vector.shape_cast %38 : vector<1xf32> to vector<1x1x1xf32>
    %40 = vector.extract %39[0, 0, 0] : f32 from vector<1x1x1xf32>
    %41 = vector.broadcast %40 : f32 to vector<1x1x1xf32>
    %c0_18 = arith.constant 0 : index
    %c0_19 = arith.constant 0 : index
    %c0_20 = arith.constant 0 : index
    %42 = vector.load %arg7[%c0_18, %c0_19, %c0_20] : memref<1x1x1xf32, #tpu.memory_space<vmem>>, vector<1x1x1xf32>
    tpu.vector_store %arg7[%c0_18, %c0_19, %c0_20], %41 {strides = array<i32>} : memref<1x1x1xf32, #tpu.memory_space<vmem>>, vector<1x1x1xf32>,
    return
  }
  func.func @transform_0(%arg0: i32) -> (i32, i32) {
    %c0_i32 = arith.constant 0 : i32
    %c0_i32_0 = arith.constant 0 : i32
    return %arg0, %c0_i32 : i32, i32
  }
  func.func @transform_1(%arg0: i32) -> (i32, i32) {
    %c0_i32 = arith.constant 0 : i32
    %c0_i32_0 = arith.constant 0 : i32
    %c0_i32_1 = arith.constant 0 : i32
    return %c0_i32, %c0_i32_0 : i32, i32
  }
  func.func @transform_2(%arg0: i32) -> (i32, i32) {
    %c0_i32 = arith.constant 0 : i32
    %c0_i32_0 = arith.constant 0 : i32
    %c0_i32_1 = arith.constant 0 : i32
    return %c0_i32, %c0_i32_0 : i32, i32
  }
  func.func @transform_3(%arg0: i32) -> (i32, i32) {
    %c0_i32 = arith.constant 0 : i32
    %c0_i32_0 = arith.constant 0 : i32
    %c0_i32_1 = arith.constant 0 : i32
    return %c0_i32, %c0_i32_0 : i32, i32
  }
  func.func @transform_4(%arg0: i32) -> (i32, i32) {
    %c0_i32 = arith.constant 0 : i32
    %c0_i32_0 = arith.constant 0 : i32
    return %arg0, %c0_i32 : i32, i32
  }
  func.func @transform_5(%arg0: i32) -> (i32, i32) {
    %c0_i32 = arith.constant 0 : i32
    %c0_i32_0 = arith.constant 0 : i32
    return %arg0, %c0_i32 : i32, i32
  }
  func.func @transform_6(%arg0: i32) -> (i32, i32, i32) {
    %c0_i32 = arith.constant 0 : i32
    %c0_i32_0 = arith.constant 0 : i32
    %c0_i32_1 = arith.constant 0 : i32
    return %arg0, %c0_i32, %c0_i32_0 : i32, i32, i32
  }
}

module attributes {stable_mosaic.version = 11 : i64} {
  func.func @_vq_kernel(%arg0: i32, %arg1: memref<128x32xf32, #tpu.memory_space<vmem>>, %arg2: memref<32x128xf32, #tpu.memory_space<vmem>>, %arg3: memref<128x32xf32, #tpu.memory_space<vmem>>, %arg4: memref<1x128xf32, #tpu.memory_space<vmem>>, %arg5: memref<128x32xf32, #tpu.memory_space<vmem>>, %arg6: memref<128x1xi32, #tpu.memory_space<vmem>>, %arg7: memref<1x1x1xf32, #tpu.memory_space<vmem>>) attributes {dimension_semantics = [#tpu.dimension_semantics<parallel>], iteration_bounds = array<i64: 1>, scalar_prefetch = 0 : i64, scratch_operands = 0 : i64, tpu.core_type = #tpu.core_type<tc>, window_params = [{transform_indices = @transform_0, window_bounds = array<i64: 128, 32>}, {pipeline_mode = #tpu.pipeline_mode<synchronous>, transform_indices = @transform_1, window_bounds = array<i64: 32, 128>}, {pipeline_mode = #tpu.pipeline_mode<synchronous>, transform_indices = @transform_2, window_bounds = array<i64: 128, 32>}, {pipeline_mode = #tpu.pipeline_mode<synchronous>, transform_indices = @transform_3, window_bounds = array<i64: 1, 128>}, {transform_indices = @transform_4, window_bounds = array<i64: 128, 32>}, {transform_indices = @transform_5, window_bounds = array<i64: 128, 1>}, {transform_indices = @transform_6, window_bounds = array<i64: 1, 1, 1>}]} {
    %c0 = arith.constant 0 : index
    %c0_0 = arith.constant 0 : index
    %0 = vector.load %arg1[%c0, %c0_0] : memref<128x32xf32, #tpu.memory_space<vmem>>, vector<128x32xf32>
    %c0_1 = arith.constant 0 : index
    %c0_2 = arith.constant 0 : index
    %1 = vector.load %arg2[%c0_1, %c0_2] : memref<32x128xf32, #tpu.memory_space<vmem>>, vector<32x128xf32>
    %cst = arith.constant dense<0.000000e+00> : vector<128x128xf32>
    %2 = tpu.matmul %0, %1, %cst {dimension_numbers = #tpu.dot_dimension_numbers<[1], [0], [0], [1], [0, 0, 1, 1], [], []>} : vector<128x32xf32>, vector<32x128xf32>, vector<128x128xf32> -> vector<128x128xf32>
    %c0_3 = arith.constant 0 : index
    %c0_4 = arith.constant 0 : index
    %3 = vector.load %arg4[%c0_3, %c0_4] : memref<1x128xf32, #tpu.memory_space<vmem>>, vector<1x128xf32>
    %cst_5 = arith.constant 2.000000e+00 : f32
    %4 = vector.broadcast %cst_5 : f32 to vector<128x128xf32>
    %5 = arith.mulf %4, %2 : vector<128x128xf32>
    %6 = vector.broadcast %3 : vector<1x128xf32> to vector<128x128xf32>
    %7 = arith.subf %6, %5 : vector<128x128xf32>
    %8 = tpu.iota {dimensions = array<i32: 1>} : vector<128x128xi32>
    %cst_6 = arith.constant dense<0x7F800000> : vector<128xf32>
    %9 = vector.multi_reduction <minimumf>, %7, %cst_6 [1] : vector<128x128xf32> to vector<128xf32>
    %10 = vector.shape_cast %9 : vector<128xf32> to vector<128x1xf32>
    %11 = vector.broadcast %10 : vector<128x1xf32> to vector<128x128xf32>
    %12 = arith.cmpf oeq, %7, %11 : vector<128x128xf32>
    %c128_i32 = arith.constant 128 : i32
    %13 = vector.broadcast %c128_i32 : i32 to vector<128x128xi32>
    %14 = arith.select %12, %8, %13 : vector<128x128xi1>, vector<128x128xi32>
    %cst_7 = arith.constant dense<2147483647> : vector<128xi32>
    %15 = vector.multi_reduction <minsi>, %14, %cst_7 [1] : vector<128x128xi32> to vector<128xi32>
    %16 = vector.shape_cast %15 : vector<128xi32> to vector<128x1xi32>
    %17 = vector.broadcast %16 : vector<128x1xi32> to vector<128x128xi32>
    %18 = arith.cmpi eq, %8, %17 : vector<128x128xi32>
    %19 = arith.extui %18 : vector<128x128xi1> to vector<128x128xi32>
    %20 = arith.sitofp %19 : vector<128x128xi32> to vector<128x128xf32>
    %c0_8 = arith.constant 0 : index
    %c0_9 = arith.constant 0 : index
    %21 = vector.load %arg3[%c0_8, %c0_9] : memref<128x32xf32, #tpu.memory_space<vmem>>, vector<128x32xf32>
    %cst_10 = arith.constant dense<0.000000e+00> : vector<128x32xf32>
    %22 = tpu.matmul %20, %21, %cst_10 {dimension_numbers = #tpu.dot_dimension_numbers<[1], [0], [0], [1], [0, 0, 1, 1], [], []>} : vector<128x128xf32>, vector<128x32xf32>, vector<128x32xf32> -> vector<128x32xf32>
    %c0_11 = arith.constant 0 : index
    %c0_12 = arith.constant 0 : index
    %23 = vector.load %arg6[%c0_11, %c0_12] : memref<128x1xi32, #tpu.memory_space<vmem>>, vector<128x1xi32>
    tpu.vector_store %arg6[%c0_11, %c0_12], %16 {strides = array<i32>} : memref<128x1xi32, #tpu.memory_space<vmem>>, vector<128x1xi32>,
    %c0_13 = arith.constant 0 : index
    %c0_14 = arith.constant 0 : index
    %24 = vector.load %arg5[%c0_13, %c0_14] : memref<128x32xf32, #tpu.memory_space<vmem>>, vector<128x32xf32>
    tpu.vector_store %arg5[%c0_13, %c0_14], %22 {strides = array<i32>} : memref<128x32xf32, #tpu.memory_space<vmem>>, vector<128x32xf32>,
    %c128_i32_15 = arith.constant 128 : i32
    %25 = arith.muli %arg0, %c128_i32_15 : i32
    %26 = tpu.iota {dimensions = array<i32: 0>} : vector<128x1xi32>
    %27 = vector.broadcast %25 : i32 to vector<128x1xi32>
    %28 = arith.addi %27, %26 : vector<128x1xi32>
    %c16_i32 = arith.constant 16 : i32
    %29 = vector.broadcast %c16_i32 : i32 to vector<128x1xi32>
    %30 = arith.cmpi slt, %28, %29 : vector<128x1xi32>
    %31 = arith.subf %0, %22 : vector<128x32xf32>
    %cst_16 = arith.constant 0.000000e+00 : f32
    %32 = vector.shape_cast %30 : vector<128x1xi1> to vector<128x1xi1>
    %33 = vector.broadcast %32 : vector<128x1xi1> to vector<128x32xi1>
    %34 = vector.broadcast %cst_16 : f32 to vector<128x32xf32>
    %35 = arith.select %33, %31, %34 : vector<128x32xi1>, vector<128x32xf32>
    %36 = arith.mulf %35, %35 : vector<128x32xf32>
    %37 = vector.shape_cast %36 : vector<128x32xf32> to vector<1x128x32xf32>
    %cst_17 = arith.constant dense<0.000000e+00> : vector<1xf32>
    %38 = vector.multi_reduction <add>, %37, %cst_17 [1, 2] : vector<1x128x32xf32> to vector<1xf32>
    %39 = vector.shape_cast %38 : vector<1xf32> to vector<1x1x1xf32>
    %40 = vector.extract %39[0, 0, 0] : f32 from vector<1x1x1xf32>
    %41 = vector.broadcast %40 : f32 to vector<1x1x1xf32>
    %c0_18 = arith.constant 0 : index
    %c0_19 = arith.constant 0 : index
    %c0_20 = arith.constant 0 : index
    %42 = vector.load %arg7[%c0_18, %c0_19, %c0_20] : memref<1x1x1xf32, #tpu.memory_space<vmem>>, vector<1x1x1xf32>
    tpu.vector_store %arg7[%c0_18, %c0_19, %c0_20], %41 {strides = array<i32>} : memref<1x1x1xf32, #tpu.memory_space<vmem>>, vector<1x1x1xf32>,
    return
  }
  func.func @transform_0(%arg0: i32) -> (i32, i32) {
    %c0_i32 = arith.constant 0 : i32
    %c0_i32_0 = arith.constant 0 : i32
    return %arg0, %c0_i32 : i32, i32
  }
  func.func @transform_1(%arg0: i32) -> (i32, i32) {
    %c0_i32 = arith.constant 0 : i32
    %c0_i32_0 = arith.constant 0 : i32
    %c0_i32_1 = arith.constant 0 : i32
    return %c0_i32, %c0_i32_0 : i32, i32
  }
  func.func @transform_2(%arg0: i32) -> (i32, i32) {
    %c0_i32 = arith.constant 0 : i32
    %c0_i32_0 = arith.constant 0 : i32
    %c0_i32_1 = arith.constant 0 : i32
    return %c0_i32, %c0_i32_0 : i32, i32
  }
  func.func @transform_3(%arg0: i32) -> (i32, i32) {
    %c0_i32 = arith.constant 0 : i32
    %c0_i32_0 = arith.constant 0 : i32
    %c0_i32_1 = arith.constant 0 : i32
    return %c0_i32, %c0_i32_0 : i32, i32
  }
  func.func @transform_4(%arg0: i32) -> (i32, i32) {
    %c0_i32 = arith.constant 0 : i32
    %c0_i32_0 = arith.constant 0 : i32
    return %arg0, %c0_i32 : i32, i32
  }
  func.func @transform_5(%arg0: i32) -> (i32, i32) {
    %c0_i32 = arith.constant 0 : i32
    %c0_i32_0 = arith.constant 0 : i32
    return %arg0, %c0_i32 : i32, i32
  }
  func.func @transform_6(%arg0: i32) -> (i32, i32, i32) {
    %c0_i32 = arith.constant 0 : i32
    %c0_i32_0 = arith.constant 0 : i32
    %c0_i32_1 = arith.constant 0 : i32
    return %arg0, %c0_i32, %c0_i32_0 : i32, i32, i32
  }
}

</mosaic_0001>

<llo_original>
// kernel: tpu_custom_call.1
$region0: #{tpu_custom_call.1}
  #allocation0 [shape = 'u32[]', space=smem, size = 0x4, offset = 0x4, fixed_abs, tag = 'smem constant byte address 0x4 - core index']
  #allocation1 [shape = 'u32[72,128]{1,0:T(1,128)}', space=vmem, size = 0x9000, scoped, tag = 'internal scratch']
  %s0 = inlined_call_operand.vmem [shape: f32[128,32], index: 0, kind: input, shape index: {}]
  %s1 = inlined_call_operand.vmem [shape: f32[32,128], index: 1, kind: input, shape index: {}]
  %s2 = inlined_call_operand.vmem [shape: f32[128,32], index: 2, kind: input, shape index: {}]
  %s3 = inlined_call_operand.vmem [shape: f32[1,128], index: 3, kind: input, shape index: {}]
  %s4 = inlined_call_operand.vmem [shape: f32[128,32], index: 4, kind: output, shape index: {0}]
  %s5 = inlined_call_operand.vmem [shape: s32[128,1], index: 5, kind: output, shape index: {1}]
  %s6 = inlined_call_operand.hbm [shape: f32[1,1,1], index: 6, kind: output, shape index: {2}]
  %7 = xla_tuple %s4, %s5, %s6
  %s8 = sld [smem:[#allocation0]]
  $region42: #{tpu_custom_call.1} parent=0
    _
  %s10 = ssub.s32 1, %s8
  %s11 = scalar_select 0, %s10, %s8
  $region1: #{tpu_custom_call.1} parent=0
    #allocation2 [shape = 'u8[512]{0}', space=vmem, size = 0x400, scoped, tag = 'output window, operand 2, single buffered']
    #allocation3 [shape = 's32[1]{0}', space=sflag, size = 0x4, scoped, tag = 'scoped memory for tpu_custom_call.1']
    %12 = vsyncpa [#allocation3], 0
    // Predicated region
    $region2: #{tpu_custom_call.1} parent=1 // pred_check
      _
    $region3: #{tpu_custom_call.1} parent=1 // pred_check_branch
      %14 = sbr.rel (0) target = $region5
    $region4: #{tpu_custom_call.1} parent=1 // pred_region
      _
    $region5: #{tpu_custom_call.1} parent=1 // pred_fallthru
      _
    // Predicated region
    $region6: #{tpu_custom_call.1} parent=1 // pred_check
      _
    $region7: #{tpu_custom_call.1} parent=1 // pred_check_branch
      %16 = sbr.rel (0) target = $region9
    $region8: #{tpu_custom_call.1} parent=1 // pred_region
      _
    $region9: #{tpu_custom_call.1} parent=1 // pred_fallthru
      _
    // Predicated region
    $region10: #{tpu_custom_call.1} parent=1 // pred_check
      _
    $region11: #{tpu_custom_call.1} parent=1 // pred_check_branch
      %18 = sbr.rel (0) target = $region13
    $region12: #{tpu_custom_call.1} parent=1 // pred_region
      _
    $region13: #{tpu_custom_call.1} parent=1 // pred_fallthru
      _
    // Predicated region
    $region14: #{tpu_custom_call.1} parent=1 // pred_check
      _
    $region15: #{tpu_custom_call.1} parent=1 // pred_check_branch
      %20 = sbr.rel (0) target = $region17
    $region16: #{tpu_custom_call.1} parent=1 // pred_region
      _
    $region17: #{tpu_custom_call.1} parent=1 // pred_fallthru
      _
    %v21 = vld [vmem:[%s0] sm:$0xff]
    %v22 = vld [vmem:[%s0 + $0x8] sm:$0xff]
    %v23 = vld [vmem:[%s0 + $0x10] sm:$0xff]
    %v24 = vld [vmem:[%s0 + $0x18] sm:$0xff]
    %v25 = vld [vmem:[%s0 + $0x20] sm:$0xff]
    %v26 = vld [vmem:[%s0 + $0x28] sm:$0xff]
    %v27 = vld [vmem:[%s0 + $0x30] sm:$0xff]
    %v28 = vld [vmem:[%s0 + $0x38] sm:$0xff]
    %v29 = vld [vmem:[%s0 + $0x40] sm:$0xff]
    %v30 = vld [vmem:[%s0 + $0x48] sm:$0xff]
    %v31 = vld [vmem:[%s0 + $0x50] sm:$0xff]
    %v32 = vld [vmem:[%s0 + $0x58] sm:$0xff]
    %v33 = vld [vmem:[%s0 + $0x60] sm:$0xff]
    %v34 = vld [vmem:[%s0 + $0x68] sm:$0xff]
    %v35 = vld [vmem:[%s0 + $0x70] sm:$0xff]
    %v36 = vld [vmem:[%s0 + $0x78] sm:$0xff]
    %v37 = vld [vmem:[%s1] sm:$0xff]
    %v38 = vld [vmem:[%s1 + $0x8] sm:$0xff]
    %v39 = vld [vmem:[%s1 + $0x10] sm:$0xff]
    %v40 = vld [vmem:[%s1 + $0x18] sm:$0xff]
    %vm41 = vcmask 261120
    %v43 = vsel %vm41, %v21, 0
    %v46 = vsel %vm41, %v22, 0
    %v49 = vsel %vm41, %v23, 0
    %v52 = vsel %vm41, %v24, 0
    %v55 = vsel %vm41, %v25, 0
    %v58 = vsel %vm41, %v26, 0
    %v61 = vsel %vm41, %v27, 0
    %v64 = vsel %vm41, %v28, 0
    %v67 = vsel %vm41, %v29, 0
    %v70 = vsel %vm41, %v30, 0
    %v73 = vsel %vm41, %v31, 0
    %v76 = vsel %vm41, %v32, 0
    %v79 = vsel %vm41, %v33, 0
    %v82 = vsel %vm41, %v34, 0
    %v85 = vsel %vm41, %v35, 0
    %v88 = vsel %vm41, %v36, 0
    %90 = vmatpush.msra.mxu0 0.0
    %91 = vmatpush.msra.mxu0 0.0
    %92 = vmatpush.msra.mxu0 0.0
    %93 = vmatpush.msra.mxu0 0.0
    %94 = vmatpush.msra.mxu0 0.0
    %95 = vmatpush.msra.mxu0 0.0
    %96 = vmatpush.msra.mxu0 0.0
    %97 = vmatpush.msra.mxu0 0.0
    %98 = vmatpush.msra.mxu0 0.0
    %99 = vmatpush.msra.mxu0 0.0
    %100 = vmatpush.msra.mxu0 0.0
    %101 = vmatpush.msra.mxu0 0.0
    %102 = vmatpush.msra.mxu0 %v40
    %103 = vmatpush.msra.mxu0 %v39
    %104 = vmatpush.msra.mxu0 %v38
    %105 = vmatpush.msra.mxu0 %v37
    %106 = vmatmul.f32.gmra.mxu0 %v43
    %v107 = vpop.f32.mrf.mxu0
    %v108 = vadd.f32 0.0, %v107
    %109 = vmatmul.f32.gmra.mxu0 %v46
    %v110 = vpop.f32.mrf.mxu0
    %v111 = vadd.f32 0.0, %v110
    %112 = vmatmul.f32.gmra.mxu0 %v49
    %v113 = vpop.f32.mrf.mxu0
    %v114 = vadd.f32 0.0, %v113
    %115 = vmatmul.f32.gmra.mxu0 %v52
    %v116 = vpop.f32.mrf.mxu0
    %v117 = vadd.f32 0.0, %v116
    %118 = vmatmul.f32.gmra.mxu0 %v55
    %v119 = vpop.f32.mrf.mxu0
    %v120 = vadd.f32 0.0, %v119
    %121 = vmatmul.f32.gmra.mxu0 %v58
    %v122 = vpop.f32.mrf.mxu0
    %v123 = vadd.f32 0.0, %v122
    %124 = vmatmul.f32.gmra.mxu0 %v61
    %v125 = vpop.f32.mrf.mxu0
    %v126 = vadd.f32 0.0, %v125
    %127 = vmatmul.f32.gmra.mxu0 %v64
    %v128 = vpop.f32.mrf.mxu0
    %v129 = vadd.f32 0.0, %v128
    %130 = vmatmul.f32.gmra.mxu0 %v67
    %v131 = vpop.f32.mrf.mxu0
    %v132 = vadd.f32 0.0, %v131
    %133 = vmatmul.f32.gmra.mxu0 %v70
    %v134 = vpop.f32.mrf.mxu0
    %v135 = vadd.f32 0.0, %v134
    %136 = vmatmul.f32.gmra.mxu0 %v73
    %v137 = vpop.f32.mrf.mxu0
    %v138 = vadd.f32 0.0, %v137
    %139 = vmatmul.f32.gmra.mxu0 %v76
    %v140 = vpop.f32.mrf.mxu0
    %v141 = vadd.f32 0.0, %v140
    %142 = vmatmul.f32.gmra.mxu0 %v79
    %v143 = vpop.f32.mrf.mxu0
    %v144 = vadd.f32 0.0, %v143
    %145 = vmatmul.f32.gmra.mxu0 %v82
    %v146 = vpop.f32.mrf.mxu0
    %v147 = vadd.f32 0.0, %v146
    %148 = vmatmul.f32.gmra.mxu0 %v85
    %v149 = vpop.f32.mrf.mxu0
    %v150 = vadd.f32 0.0, %v149
    %151 = vmatmul.f32.gmra.mxu0 %v88
    %v152 = vpop.f32.mrf.mxu0
    %v153 = vadd.f32 0.0, %v152
    %154 = vdwg.mxu0
    %v155 = vld [vmem:[%s3] sm:$0x1]
    %v156 = vmul.f32 %v108, 2.0
    %v157 = vmul.f32 %v111, 2.0
    %v158 = vmul.f32 %v114, 2.0
    %v159 = vmul.f32 %v117, 2.0
    %v160 = vmul.f32 %v120, 2.0
    %v161 = vmul.f32 %v123, 2.0
    %v162 = vmul.f32 %v126, 2.0
    %v163 = vmul.f32 %v129, 2.0
    %v164 = vmul.f32 %v132, 2.0
    %v165 = vmul.f32 %v135, 2.0
    %v166 = vmul.f32 %v138, 2.0
    %v167 = vmul.f32 %v141, 2.0
    %v168 = vmul.f32 %v144, 2.0
    %v169 = vmul.f32 %v147, 2.0
    %v170 = vmul.f32 %v150, 2.0
    %v171 = vmul.f32 %v153, 2.0
    %v173 = vperm.slane %v155, 0
    %v175 = vsub.f32 %v173, %v156
    %v176 = vsub.f32 %v173, %v157
    %v177 = vsub.f32 %v173, %v158
    %v178 = vsub.f32 %v173, %v159
    %v179 = vsub.f32 %v173, %v160
    %v180 = vsub.f32 %v173, %v161
    %v181 = vsub.f32 %v173, %v162
    %v182 = vsub.f32 %v173, %v163
    %v183 = vsub.f32 %v173, %v164
    %v184 = vsub.f32 %v173, %v165
    %v185 = vsub.f32 %v173, %v166
    %v186 = vsub.f32 %v173, %v167
    %v187 = vsub.f32 %v173, %v168
    %v188 = vsub.f32 %v173, %v169
    %v189 = vsub.f32 %v173, %v170
    %v190 = vsub.f32 %v173, %v171
    %v191 = vlaneseq
    %v192 = vand.u32 %v191, 127
    %193 = vmin.xlane.f32.xlu0 %v175
    %v194 = vpop.xlane.xlu0 %193
    %195 = vmin.xlane.f32.xlu0 %v176
    %v196 = vpop.xlane.xlu0 %195
    %197 = vmin.xlane.f32.xlu0 %v177
    %v198 = vpop.xlane.xlu0 %197
    %199 = vmin.xlane.f32.xlu0 %v178
    %v200 = vpop.xlane.xlu0 %199
    %201 = vmin.xlane.f32.xlu0 %v179
    %v202 = vpop.xlane.xlu0 %201
    %203 = vmin.xlane.f32.xlu0 %v180
    %v204 = vpop.xlane.xlu0 %203
    %205 = vmin.xlane.f32.xlu0 %v181
    %v206 = vpop.xlane.xlu0 %205
    %207 = vmin.xlane.f32.xlu0 %v182
    %v208 = vpop.xlane.xlu0 %207
    %209 = vmin.xlane.f32.xlu0 %v183
    %v210 = vpop.xlane.xlu0 %209
    %211 = vmin.xlane.f32.xlu0 %v184
    %v212 = vpop.xlane.xlu0 %211
    %213 = vmin.xlane.f32.xlu0 %v185
    %v214 = vpop.xlane.xlu0 %213
    %215 = vmin.xlane.f32.xlu0 %v186
    %v216 = vpop.xlane.xlu0 %215
    %217 = vmin.xlane.f32.xlu0 %v187
    %v218 = vpop.xlane.xlu0 %217
    %219 = vmin.xlane.f32.xlu0 %v188
    %v220 = vpop.xlane.xlu0 %219
    %221 = vmin.xlane.f32.xlu0 %v189
    %v222 = vpop.xlane.xlu0 %221
    %223 = vmin.xlane.f32.xlu0 %v190
    %v224 = vpop.xlane.xlu0 %223
    %vm225 = vcmp.eq.f32.partialorder %v175, %v194
    %vm226 = vcmp.eq.f32.partialorder %v176, %v196
    %vm227 = vcmp.eq.f32.partialorder %v177, %v198
    %vm228 = vcmp.eq.f32.partialorder %v178, %v200
    %vm229 = vcmp.eq.f32.partialorder %v179, %v202
    %vm230 = vcmp.eq.f32.partialorder %v180, %v204
    %vm231 = vcmp.eq.f32.partialorder %v181, %v206
    %vm232 = vcmp.eq.f32.partialorder %v182, %v208
    %vm233 = vcmp.eq.f32.partialorder %v183, %v210
    %vm234 = vcmp.eq.f32.partialorder %v184, %v212
    %vm235 = vcmp.eq.f32.partialorder %v185, %v214
    %vm236 = vcmp.eq.f32.partialorder %v186, %v216
    %vm237 = vcmp.eq.f32.partialorder %v187, %v218
    %vm238 = vcmp.eq.f32.partialorder %v188, %v220
    %vm239 = vcmp.eq.f32.partialorder %v189, %v222
    %vm240 = vcmp.eq.f32.partialorder %v190, %v224
    %v241 = vsel %vm225, %v192, 128
    %v242 = vsel %vm226, %v192, 128
    %v243 = vsel %vm227, %v192, 128
    %v244 = vsel %vm228, %v192, 128
    %v245 = vsel %vm229, %v192, 128
    %v246 = vsel %vm230, %v192, 128
    %v247 = vsel %vm231, %v192, 128
    %v248 = vsel %vm232, %v192, 128
    %v249 = vsel %vm233, %v192, 128
    %v250 = vsel %vm234, %v192, 128
    %v251 = vsel %vm235, %v192, 128
    %v252 = vsel %vm236, %v192, 128
    %v253 = vsel %vm237, %v192, 128
    %v254 = vsel %vm238, %v192, 128
    %v255 = vsel %vm239, %v192, 128
    %v256 = vsel %vm240, %v192, 128
    %v257 = vand.u32 %v241, 65535
    %v258 = vshra.s32 %v241, 16
    %v259 = vcvt.s32.f32 %v257
    %v260 = vcvt.s32.f32 %v258
    %261 = vmin.xlane.f32.xlu0 %v260
    %v262 = vpop.xlane.xlu0 %261
    %vm263 = vcmp.eq.f32.partialorder %v260, %v262
    %v264 = vsel %vm263, %v259, inf
    %265 = vmin.xlane.f32.xlu0 %v264
    %v266 = vpop.xlane.xlu0 %265
    %v267 = vcvt.f32.s32 %v266
    %v268 = vcvt.f32.s32 %v262
    %v269 = vshll.u32 %v268, 16
    %v270 = vadd.s32 %v269, %v267
    %v271 = vand.u32 %v242, 65535
    %v272 = vshra.s32 %v242, 16
    %v273 = vcvt.s32.f32 %v271
    %v274 = vcvt.s32.f32 %v272
    %275 = vmin.xlane.f32.xlu0 %v274
    %v276 = vpop.xlane.xlu0 %275
    %vm277 = vcmp.eq.f32.partialorder %v274, %v276
    %v278 = vsel %vm277, %v273, inf
    %279 = vmin.xlane.f32.xlu0 %v278
    %v280 = vpop.xlane.xlu0 %279
    %v281 = vcvt.f32.s32 %v280
    %v282 = vcvt.f32.s32 %v276
    %v283 = vshll.u32 %v282, 16
    %v284 = vadd.s32 %v283, %v281
    %v285 = vand.u32 %v243, 65535
    %v286 = vshra.s32 %v243, 16
    %v287 = vcvt.s32.f32 %v285
    %v288 = vcvt.s32.f32 %v286
    %289 = vmin.xlane.f32.xlu0 %v288
    %v290 = vpop.xlane.xlu0 %289
    %vm291 = vcmp.eq.f32.partialorder %v288, %v290
    %v292 = vsel %vm291, %v287, inf
    %293 = vmin.xlane.f32.xlu0 %v292
    %v294 = vpop.xlane.xlu0 %293
    %v295 = vcvt.f32.s32 %v294
    %v296 = vcvt.f32.s32 %v290
    %v297 = vshll.u32 %v296, 16
    %v298 = vadd.s32 %v297, %v295
    %v299 = vand.u32 %v244, 65535
    %v300 = vshra.s32 %v244, 16
    %v301 = vcvt.s32.f32 %v299
    %v302 = vcvt.s32.f32 %v300
    %303 = vmin.xlane.f32.xlu0 %v302
    %v304 = vpop.xlane.xlu0 %303
    %vm305 = vcmp.eq.f32.partialorder %v302, %v304
    %v306 = vsel %vm305, %v301, inf
    %307 = vmin.xlane.f32.xlu0 %v306
    %v308 = vpop.xlane.xlu0 %307
    %v309 = vcvt.f32.s32 %v308
    %v310 = vcvt.f32.s32 %v304
    %v311 = vshll.u32 %v310, 16
    %v312 = vadd.s32 %v311, %v309
    %v313 = vand.u32 %v245, 65535
    %v314 = vshra.s32 %v245, 16
    %v315 = vcvt.s32.f32 %v313
    %v316 = vcvt.s32.f32 %v314
    %317 = vmin.xlane.f32.xlu0 %v316
    %v318 = vpop.xlane.xlu0 %317
    %vm319 = vcmp.eq.f32.partialorder %v316, %v318
    %v320 = vsel %vm319, %v315, inf
    %321 = vmin.xlane.f32.xlu0 %v320
    %v322 = vpop.xlane.xlu0 %321
    %v323 = vcvt.f32.s32 %v322
    %v324 = vcvt.f32.s32 %v318
    %v325 = vshll.u32 %v324, 16
    %v326 = vadd.s32 %v325, %v323
    %v327 = vand.u32 %v246, 65535
    %v328 = vshra.s32 %v246, 16
    %v329 = vcvt.s32.f32 %v327
    %v330 = vcvt.s32.f32 %v328
    %331 = vmin.xlane.f32.xlu0 %v330
    %v332 = vpop.xlane.xlu0 %331
    %vm333 = vcmp.eq.f32.partialorder %v330, %v332
    %v334 = vsel %vm333, %v329, inf
    %335 = vmin.xlane.f32.xlu0 %v334
    %v336 = vpop.xlane.xlu0 %335
    %v337 = vcvt.f32.s32 %v336
    %v338 = vcvt.f32.s32 %v332
    %v339 = vshll.u32 %v338, 16
    %v340 = vadd.s32 %v339, %v337
    %v341 = vand.u32 %v247, 65535
    %v342 = vshra.s32 %v247, 16
    %v343 = vcvt.s32.f32 %v341
    %v344 = vcvt.s32.f32 %v342
    %345 = vmin.xlane.f32.xlu0 %v344
    %v346 = vpop.xlane.xlu0 %345
    %vm347 = vcmp.eq.f32.partialorder %v344, %v346
    %v348 = vsel %vm347, %v343, inf
    %349 = vmin.xlane.f32.xlu0 %v348
    %v350 = vpop.xlane.xlu0 %349
    %v351 = vcvt.f32.s32 %v350
    %v352 = vcvt.f32.s32 %v346
    %v353 = vshll.u32 %v352, 16
    %v354 = vadd.s32 %v353, %v351
    %v355 = vand.u32 %v248, 65535
    %v356 = vshra.s32 %v248, 16
    %v357 = vcvt.s32.f32 %v355
    %v358 = vcvt.s32.f32 %v356
    %359 = vmin.xlane.f32.xlu0 %v358
    %v360 = vpop.xlane.xlu0 %359
    %vm361 = vcmp.eq.f32.partialorder %v358, %v360
    %v362 = vsel %vm361, %v357, inf
    %363 = vmin.xlane.f32.xlu0 %v362
    %v364 = vpop.xlane.xlu0 %363
    %v365 = vcvt.f32.s32 %v364
    %v366 = vcvt.f32.s32 %v360
    %v367 = vshll.u32 %v366, 16
    %v368 = vadd.s32 %v367, %v365
    %v369 = vand.u32 %v249, 65535
    %v370 = vshra.s32 %v249, 16
    %v371 = vcvt.s32.f32 %v369
    %v372 = vcvt.s32.f32 %v370
    %373 = vmin.xlane.f32.xlu0 %v372
    %v374 = vpop.xlane.xlu0 %373
    %vm375 = vcmp.eq.f32.partialorder %v372, %v374
    %v376 = vsel %vm375, %v371, inf
    %377 = vmin.xlane.f32.xlu0 %v376
    %v378 = vpop.xlane.xlu0 %377
    %v379 = vcvt.f32.s32 %v378
    %v380 = vcvt.f32.s32 %v374
    %v381 = vshll.u32 %v380, 16
    %v382 = vadd.s32 %v381, %v379
    %v383 = vand.u32 %v250, 65535
    %v384 = vshra.s32 %v250, 16
    %v385 = vcvt.s32.f32 %v383
    %v386 = vcvt.s32.f32 %v384
    %387 = vmin.xlane.f32.xlu0 %v386
    %v388 = vpop.xlane.xlu0 %387
    %vm389 = vcmp.eq.f32.partialorder %v386, %v388
    %v390 = vsel %vm389, %v385, inf
    %391 = vmin.xlane.f32.xlu0 %v390
    %v392 = vpop.xlane.xlu0 %391
    %v393 = vcvt.f32.s32 %v392
    %v394 = vcvt.f32.s32 %v388
    %v395 = vshll.u32 %v394, 16
    %v396 = vadd.s32 %v395, %v393
    %v397 = vand.u32 %v251, 65535
    %v398 = vshra.s32 %v251, 16
    %v399 = vcvt.s32.f32 %v397
    %v400 = vcvt.s32.f32 %v398
    %401 = vmin.xlane.f32.xlu0 %v400
    %v402 = vpop.xlane.xlu0 %401
    %vm403 = vcmp.eq.f32.partialorder %v400, %v402
    %v404 = vsel %vm403, %v399, inf
    %405 = vmin.xlane.f32.xlu0 %v404
    %v406 = vpop.xlane.xlu0 %405
    %v407 = vcvt.f32.s32 %v406
    %v408 = vcvt.f32.s32 %v402
    %v409 = vshll.u32 %v408, 16
    %v410 = vadd.s32 %v409, %v407
    %v411 = vand.u32 %v252, 65535
    %v412 = vshra.s32 %v252, 16
    %v413 = vcvt.s32.f32 %v411
    %v414 = vcvt.s32.f32 %v412
    %415 = vmin.xlane.f32.xlu0 %v414
    %v416 = vpop.xlane.xlu0 %415
    %vm417 = vcmp.eq.f32.partialorder %v414, %v416
    %v418 = vsel %vm417, %v413, inf
    %419 = vmin.xlane.f32.xlu0 %v418
    %v420 = vpop.xlane.xlu0 %419
    %v421 = vcvt.f32.s32 %v420
    %v422 = vcvt.f32.s32 %v416
    %v423 = vshll.u32 %v422, 16
    %v424 = vadd.s32 %v423, %v421
    %v425 = vand.u32 %v253, 65535
    %v426 = vshra.s32 %v253, 16
    %v427 = vcvt.s32.f32 %v425
    %v428 = vcvt.s32.f32 %v426
    %429 = vmin.xlane.f32.xlu0 %v428
    %v430 = vpop.xlane.xlu0 %429
    %vm431 = vcmp.eq.f32.partialorder %v428, %v430
    %v432 = vsel %vm431, %v427, inf
    %433 = vmin.xlane.f32.xlu0 %v432
    %v434 = vpop.xlane.xlu0 %433
    %v435 = vcvt.f32.s32 %v434
    %v436 = vcvt.f32.s32 %v430
    %v437 = vshll.u32 %v436, 16
    %v438 = vadd.s32 %v437, %v435
    %v439 = vand.u32 %v254, 65535
    %v440 = vshra.s32 %v254, 16
    %v441 = vcvt.s32.f32 %v439
    %v442 = vcvt.s32.f32 %v440
    %443 = vmin.xlane.f32.xlu0 %v442
    %v444 = vpop.xlane.xlu0 %443
    %vm445 = vcmp.eq.f32.partialorder %v442, %v444
    %v446 = vsel %vm445, %v441, inf
    %447 = vmin.xlane.f32.xlu0 %v446
    %v448 = vpop.xlane.xlu0 %447
    %v449 = vcvt.f32.s32 %v448
    %v450 = vcvt.f32.s32 %v444
    %v451 = vshll.u32 %v450, 16
    %v452 = vadd.s32 %v451, %v449
    %v453 = vand.u32 %v255, 65535
    %v454 = vshra.s32 %v255, 16
    %v455 = vcvt.s32.f32 %v453
    %v456 = vcvt.s32.f32 %v454
    %457 = vmin.xlane.f32.xlu0 %v456
    %v458 = vpop.xlane.xlu0 %457
    %vm459 = vcmp.eq.f32.partialorder %v456, %v458
    %v460 = vsel %vm459, %v455, inf
    %461 = vmin.xlane.f32.xlu0 %v460
    %v462 = vpop.xlane.xlu0 %461
    %v463 = vcvt.f32.s32 %v462
    %v464 = vcvt.f32.s32 %v458
    %v465 = vshll.u32 %v464, 16
    %v466 = vadd.s32 %v465, %v463
    %v467 = vand.u32 %v256, 65535
    %v468 = vshra.s32 %v256, 16
    %v469 = vcvt.s32.f32 %v467
    %v470 = vcvt.s32.f32 %v468
    %471 = vmin.xlane.f32.xlu0 %v470
    %v472 = vpop.xlane.xlu0 %471
    %vm473 = vcmp.eq.f32.partialorder %v470, %v472
    %v474 = vsel %vm473, %v469, inf
    %475 = vmin.xlane.f32.xlu0 %v474
    %v476 = vpop.xlane.xlu0 %475
    %v477 = vcvt.f32.s32 %v476
    %v478 = vcvt.f32.s32 %v472
    %v479 = vshll.u32 %v478, 16
    %v480 = vadd.s32 %v479, %v477
    %vm481 = vcmp.eq.s32.totalorder %v192, %v270
    %vm482 = vcmp.eq.s32.totalorder %v192, %v284
    %vm483 = vcmp.eq.s32.totalorder %v192, %v298
    %vm484 = vcmp.eq.s32.totalorder %v192, %v312
    %vm485 = vcmp.eq.s32.totalorder %v192, %v326
    %vm486 = vcmp.eq.s32.totalorder %v192, %v340
    %vm487 = vcmp.eq.s32.totalorder %v192, %v354
    %vm488 = vcmp.eq.s32.totalorder %v192, %v368
    %vm489 = vcmp.eq.s32.totalorder %v192, %v382
    %vm490 = vcmp.eq.s32.totalorder %v192, %v396
    %vm491 = vcmp.eq.s32.totalorder %v192, %v410
    %vm492 = vcmp.eq.s32.totalorder %v192, %v424
    %vm493 = vcmp.eq.s32.totalorder %v192, %v438
    %vm494 = vcmp.eq.s32.totalorder %v192, %v452
    %vm495 = vcmp.eq.s32.totalorder %v192, %v466
    %vm496 = vcmp.eq.s32.totalorder %v192, %v480
    %v497 = vsel %vm481, 1, 0
    %v498 = vsel %vm482, 1, 0
    %v499 = vsel %vm483, 1, 0
    %v500 = vsel %vm484, 1, 0
    %v501 = vsel %vm485, 1, 0
    %v502 = vsel %vm486, 1, 0
    %v503 = vsel %vm487, 1, 0
    %v504 = vsel %vm488, 1, 0
    %v505 = vsel %vm489, 1, 0
    %v506 = vsel %vm490, 1, 0
    %v507 = vsel %vm491, 1, 0
    %v508 = vsel %vm492, 1, 0
    %v509 = vsel %vm493, 1, 0
    %v510 = vsel %vm494, 1, 0
    %v511 = vsel %vm495, 1, 0
    %v512 = vsel %vm496, 1, 0
    %v513 = vcvt.s32.f32 %v497
    %v514 = vcvt.s32.f32 %v498
    %v515 = vcvt.s32.f32 %v499
    %v516 = vcvt.s32.f32 %v500
    %v517 = vcvt.s32.f32 %v501
    %v518 = vcvt.s32.f32 %v502
    %v519 = vcvt.s32.f32 %v503
    %v520 = vcvt.s32.f32 %v504
    %v521 = vcvt.s32.f32 %v505
    %v522 = vcvt.s32.f32 %v506
    %v523 = vcvt.s32.f32 %v507
    %v524 = vcvt.s32.f32 %v508
    %v525 = vcvt.s32.f32 %v509
    %v526 = vcvt.s32.f32 %v510
    %v527 = vcvt.s32.f32 %v511
    %v528 = vcvt.s32.f32 %v512
    %v529 = vld [vmem:[%s2] sm:$0xff]
    %v530 = vld [vmem:[%s2 + $0x8] sm:$0xff]
    %v531 = vld [vmem:[%s2 + $0x10] sm:$0xff]
    %v532 = vld [vmem:[%s2 + $0x18] sm:$0xff]
    %v533 = vld [vmem:[%s2 + $0x20] sm:$0xff]
    %v534 = vld [vmem:[%s2 + $0x28] sm:$0xff]
    %v535 = vld [vmem:[%s2 + $0x30] sm:$0xff]
    %v536 = vld [vmem:[%s2 + $0x38] sm:$0xff]
    %v537 = vld [vmem:[%s2 + $0x40] sm:$0xff]
    %v538 = vld [vmem:[%s2 + $0x48] sm:$0xff]
    %v539 = vld [vmem:[%s2 + $0x50] sm:$0xff]
    %v540 = vld [vmem:[%s2 + $0x58] sm:$0xff]
    %v541 = vld [vmem:[%s2 + $0x60] sm:$0xff]
    %v542 = vld [vmem:[%s2 + $0x68] sm:$0xff]
    %v543 = vld [vmem:[%s2 + $0x70] sm:$0xff]
    %v544 = vld [vmem:[%s2 + $0x78] sm:$0xff]
    %545 = vmatpush.msra.mxu0 %v544
    %546 = vmatpush.msra.mxu0 %v543
    %547 = vmatpush.msra.mxu0 %v542
    %548 = vmatpush.msra.mxu0 %v541
    %549 = vmatpush.msra.mxu0 %v540
    %550 = vmatpush.msra.mxu0 %v539
    %551 = vmatpush.msra.mxu0 %v538
    %552 = vmatpush.msra.mxu0 %v537
    %553 = vmatpush.msra.mxu0 %v536
    %554 = vmatpush.msra.mxu0 %v535
    %555 = vmatpush.msra.mxu0 %v534
    %556 = vmatpush.msra.mxu0 %v533
    %557 = vmatpush.msra.mxu0 %v532
    %558 = vmatpush.msra.mxu0 %v531
    %559 = vmatpush.msra.mxu0 %v530
    %560 = vmatpush.msra.mxu0 %v529
    %561 = vmatmul.f32.gmra.mxu0 %v513
    %v562 = vpop.f32.mrf.mxu0
    %v563 = vadd.f32 0.0, %v562
    %564 = vmatmul.f32.gmra.mxu0 %v514
    %v565 = vpop.f32.mrf.mxu0
    %v566 = vadd.f32 0.0, %v565
    %567 = vmatmul.f32.gmra.mxu0 %v515
    %v568 = vpop.f32.mrf.mxu0
    %v569 = vadd.f32 0.0, %v568
    %570 = vmatmul.f32.gmra.mxu0 %v516
    %v571 = vpop.f32.mrf.mxu0
    %v572 = vadd.f32 0.0, %v571
    %573 = vmatmul.f32.gmra.mxu0 %v517
    %v574 = vpop.f32.mrf.mxu0
    %v575 = vadd.f32 0.0, %v574
    %576 = vmatmul.f32.gmra.mxu0 %v518
    %v577 = vpop.f32.mrf.mxu0
    %v578 = vadd.f32 0.0, %v577
    %579 = vmatmul.f32.gmra.mxu0 %v519
    %v580 = vpop.f32.mrf.mxu0
    %v581 = vadd.f32 0.0, %v580
    %582 = vmatmul.f32.gmra.mxu0 %v520
    %v583 = vpop.f32.mrf.mxu0
    %v584 = vadd.f32 0.0, %v583
    %585 = vmatmul.f32.gmra.mxu0 %v521
    %v586 = vpop.f32.mrf.mxu0
    %v587 = vadd.f32 0.0, %v586
    %588 = vmatmul.f32.gmra.mxu0 %v522
    %v589 = vpop.f32.mrf.mxu0
    %v590 = vadd.f32 0.0, %v589
    %591 = vmatmul.f32.gmra.mxu0 %v523
    %v592 = vpop.f32.mrf.mxu0
    %v593 = vadd.f32 0.0, %v592
    %594 = vmatmul.f32.gmra.mxu0 %v524
    %v595 = vpop.f32.mrf.mxu0
    %v596 = vadd.f32 0.0, %v595
    %597 = vmatmul.f32.gmra.mxu0 %v525
    %v598 = vpop.f32.mrf.mxu0
    %v599 = vadd.f32 0.0, %v598
    %600 = vmatmul.f32.gmra.mxu0 %v526
    %v601 = vpop.f32.mrf.mxu0
    %v602 = vadd.f32 0.0, %v601
    %603 = vmatmul.f32.gmra.mxu0 %v527
    %v604 = vpop.f32.mrf.mxu0
    %v605 = vadd.f32 0.0, %v604
    %606 = vmatmul.f32.gmra.mxu0 %v528
    %v607 = vpop.f32.mrf.mxu0
    %v608 = vadd.f32 0.0, %v607
    %609 = vdwg.mxu0
    %vm610 = vcmask 7168
    %611 = vst.msk [vmem:[%s5] sm:$0xff] %vm610, %v270
    %612 = vst.msk [vmem:[%s5 + $0x8] sm:$0xff] %vm610, %v284
    %613 = vst.msk [vmem:[%s5 + $0x10] sm:$0xff] %vm610, %v298
    %614 = vst.msk [vmem:[%s5 + $0x18] sm:$0xff] %vm610, %v312
    %615 = vst.msk [vmem:[%s5 + $0x20] sm:$0xff] %vm610, %v326
    %616 = vst.msk [vmem:[%s5 + $0x28] sm:$0xff] %vm610, %v340
    %617 = vst.msk [vmem:[%s5 + $0x30] sm:$0xff] %vm610, %v354
    %618 = vst.msk [vmem:[%s5 + $0x38] sm:$0xff] %vm610, %v368
    %619 = vst.msk [vmem:[%s5 + $0x40] sm:$0xff] %vm610, %v382
    %620 = vst.msk [vmem:[%s5 + $0x48] sm:$0xff] %vm610, %v396
    %621 = vst.msk [vmem:[%s5 + $0x50] sm:$0xff] %vm610, %v410
    %622 = vst.msk [vmem:[%s5 + $0x58] sm:$0xff] %vm610, %v424
    %623 = vst.msk [vmem:[%s5 + $0x60] sm:$0xff] %vm610, %v438
    %624 = vst.msk [vmem:[%s5 + $0x68] sm:$0xff] %vm610, %v452
    %625 = vst.msk [vmem:[%s5 + $0x70] sm:$0xff] %vm610, %v466
    %626 = vst.msk [vmem:[%s5 + $0x78] sm:$0xff] %vm610, %v480
    %627 = vst.msk [vmem:[%s4] sm:$0xff] %vm41, %v563
    %628 = vst.msk [vmem:[%s4 + $0x8] sm:$0xff] %vm41, %v566
    %629 = vst.msk [vmem:[%s4 + $0x10] sm:$0xff] %vm41, %v569
    %630 = vst.msk [vmem:[%s4 + $0x18] sm:$0xff] %vm41, %v572
    %631 = vst.msk [vmem:[%s4 + $0x20] sm:$0xff] %vm41, %v575
    %632 = vst.msk [vmem:[%s4 + $0x28] sm:$0xff] %vm41, %v578
    %633 = vst.msk [vmem:[%s4 + $0x30] sm:$0xff] %vm41, %v581
    %634 = vst.msk [vmem:[%s4 + $0x38] sm:$0xff] %vm41, %v584
    %635 = vst.msk [vmem:[%s4 + $0x40] sm:$0xff] %vm41, %v587
    %636 = vst.msk [vmem:[%s4 + $0x48] sm:$0xff] %vm41, %v590
    %637 = vst.msk [vmem:[%s4 + $0x50] sm:$0xff] %vm41, %v593
    %638 = vst.msk [vmem:[%s4 + $0x58] sm:$0xff] %vm41, %v596
    %639 = vst.msk [vmem:[%s4 + $0x60] sm:$0xff] %vm41, %v599
    %640 = vst.msk [vmem:[%s4 + $0x68] sm:$0xff] %vm41, %v602
    %641 = vst.msk [vmem:[%s4 + $0x70] sm:$0xff] %vm41, %v605
    %642 = vst.msk [vmem:[%s4 + $0x78] sm:$0xff] %vm41, %v608
    %s643 = smul.u32 0, 128
    %v644 = vlaneseq
    %v645 = vshrl.u32 %v644, 7
    %v646 = vadd.s32 %v645, 8
    %v647 = vadd.s32 %v645, 16
    %v648 = vadd.s32 %v645, 24
    %v649 = vadd.s32 %v645, 32
    %v650 = vadd.s32 %v645, 40
    %v651 = vadd.s32 %v645, 48
    %v652 = vadd.s32 %v645, 56
    %v653 = vadd.s32 %v645, 64
    %v654 = vadd.s32 %v645, 72
    %v655 = vadd.s32 %v645, 80
    %v656 = vadd.s32 %v645, 88
    %v657 = vadd.s32 %v645, 96
    %v658 = vadd.s32 %v645, 104
    %v659 = vadd.s32 %v645, 112
    %v660 = vadd.s32 %v645, 120
    %v661 = vstv %s643
    %v662 = vadd.s32 %v661, %v645
    %v663 = vadd.s32 %v661, %v646
    %v664 = vadd.s32 %v661, %v647
    %v665 = vadd.s32 %v661, %v648
    %v666 = vadd.s32 %v661, %v649
    %v667 = vadd.s32 %v661, %v650
    %v668 = vadd.s32 %v661, %v651
    %v669 = vadd.s32 %v661, %v652
    %v670 = vadd.s32 %v661, %v653
    %v671 = vadd.s32 %v661, %v654
    %v672 = vadd.s32 %v661, %v655
    %v673 = vadd.s32 %v661, %v656
    %v674 = vadd.s32 %v661, %v657
    %v675 = vadd.s32 %v661, %v658
    %v676 = vadd.s32 %v661, %v659
    %v677 = vadd.s32 %v661, %v660
    %vm678 = vcmp.lt.s32.totalorder %v662, 16
    %vm679 = vcmp.lt.s32.totalorder %v663, 16
    %vm680 = vcmp.lt.s32.totalorder %v664, 16
    %vm681 = vcmp.lt.s32.totalorder %v665, 16
    %vm682 = vcmp.lt.s32.totalorder %v666, 16
    %vm683 = vcmp.lt.s32.totalorder %v667, 16
    %vm684 = vcmp.lt.s32.totalorder %v668, 16
    %vm685 = vcmp.lt.s32.totalorder %v669, 16
    %vm686 = vcmp.lt.s32.totalorder %v670, 16
    %vm687 = vcmp.lt.s32.totalorder %v671, 16
    %vm688 = vcmp.lt.s32.totalorder %v672, 16
    %vm689 = vcmp.lt.s32.totalorder %v673, 16
    %vm690 = vcmp.lt.s32.totalorder %v674, 16
    %vm691 = vcmp.lt.s32.totalorder %v675, 16
    %vm692 = vcmp.lt.s32.totalorder %v676, 16
    %vm693 = vcmp.lt.s32.totalorder %v677, 16
    %v694 = vsub.f32 %v21, %v563
    %v695 = vsub.f32 %v22, %v566
    %v696 = vsub.f32 %v23, %v569
    %v697 = vsub.f32 %v24, %v572
    %v698 = vsub.f32 %v25, %v575
    %v699 = vsub.f32 %v26, %v578
    %v700 = vsub.f32 %v27, %v581
    %v701 = vsub.f32 %v28, %v584
    %v702 = vsub.f32 %v29, %v587
    %v703 = vsub.f32 %v30, %v590
    %v704 = vsub.f32 %v31, %v593
    %v705 = vsub.f32 %v32, %v596
    %v706 = vsub.f32 %v33, %v599
    %v707 = vsub.f32 %v34, %v602
    %v708 = vsub.f32 %v35, %v605
    %v709 = vsub.f32 %v36, %v608
    %v710 = vsel %vm678, 1, 0
    %v711 = vsel %vm679, 1, 0
    %v712 = vsel %vm680, 1, 0
    %v713 = vsel %vm681, 1, 0
    %v714 = vsel %vm682, 1, 0
    %v715 = vsel %vm683, 1, 0
    %v716 = vsel %vm684, 1, 0
    %v717 = vsel %vm685, 1, 0
    %v718 = vsel %vm686, 1, 0
    %v719 = vsel %vm687, 1, 0
    %v720 = vsel %vm688, 1, 0
    %v721 = vsel %vm689, 1, 0
    %v722 = vsel %vm690, 1, 0
    %v723 = vsel %vm691, 1, 0
    %v724 = vsel %vm692, 1, 0
    %v725 = vsel %vm693, 1, 0
    %vm726 = vcmp.eq.s32.totalorder %v710, 1
    %vm727 = vcmp.eq.s32.totalorder %v711, 1
    %vm728 = vcmp.eq.s32.totalorder %v712, 1
    %vm729 = vcmp.eq.s32.totalorder %v713, 1
    %vm730 = vcmp.eq.s32.totalorder %v714, 1
    %vm731 = vcmp.eq.s32.totalorder %v715, 1
    %vm732 = vcmp.eq.s32.totalorder %v716, 1
    %vm733 = vcmp.eq.s32.totalorder %v717, 1
    %vm734 = vcmp.eq.s32.totalorder %v718, 1
    %vm735 = vcmp.eq.s32.totalorder %v719, 1
    %vm736 = vcmp.eq.s32.totalorder %v720, 1
    %vm737 = vcmp.eq.s32.totalorder %v721, 1
    %vm738 = vcmp.eq.s32.totalorder %v722, 1
    %vm739 = vcmp.eq.s32.totalorder %v723, 1
    %vm740 = vcmp.eq.s32.totalorder %v724, 1
    %vm741 = vcmp.eq.s32.totalorder %v725, 1
    %v742 = vsel %vm726, %v694, 0.0
    %v743 = vsel %vm727, %v695, 0.0
    %v744 = vsel %vm728, %v696, 0.0
    %v745 = vsel %vm729, %v697, 0.0
    %v746 = vsel %vm730, %v698, 0.0
    %v747 = vsel %vm731, %v699, 0.0
    %v748 = vsel %vm732, %v700, 0.0
    %v749 = vsel %vm733, %v701, 0.0
    %v750 = vsel %vm734, %v702, 0.0
    %v751 = vsel %vm735, %v703, 0.0
    %v752 = vsel %vm736, %v704, 0.0
    %v753 = vsel %vm737, %v705, 0.0
    %v754 = vsel %vm738, %v706, 0.0
    %v755 = vsel %vm739, %v707, 0.0
    %v756 = vsel %vm740, %v708, 0.0
    %v757 = vsel %vm741, %v709, 0.0
    %v758 = vmul.f32 %v742, %v742
    %v759 = vmul.f32 %v743, %v743
    %v760 = vmul.f32 %v744, %v744
    %v761 = vmul.f32 %v745, %v745
    %v762 = vmul.f32 %v746, %v746
    %v763 = vmul.f32 %v747, %v747
    %v764 = vmul.f32 %v748, %v748
    %v765 = vmul.f32 %v749, %v749
    %v766 = vmul.f32 %v750, %v750
    %v767 = vmul.f32 %v751, %v751
    %v768 = vmul.f32 %v752, %v752
    %v769 = vmul.f32 %v753, %v753
    %v770 = vmul.f32 %v754, %v754
    %v771 = vmul.f32 %v755, %v755
    %v772 = vmul.f32 %v756, %v756
    %v773 = vmul.f32 %v757, %v757
    %v774 = vsel %vm41, %v758, 0.0
    %v775 = vsel %vm41, %v759, 0.0
    %v776 = vadd.f32 %v774, %v775
    %v777 = vsel %vm41, %v760, 0.0
    %v778 = vadd.f32 %v776, %v777
    %v779 = vsel %vm41, %v761, 0.0
    %v780 = vadd.f32 %v778, %v779
    %v781 = vsel %vm41, %v762, 0.0
    %v782 = vadd.f32 %v780, %v781
    %v783 = vsel %vm41, %v763, 0.0
    %v784 = vadd.f32 %v782, %v783
    %v785 = vsel %vm41, %v764, 0.0
    %v786 = vadd.f32 %v784, %v785
    %v787 = vsel %vm41, %v765, 0.0
    %v788 = vadd.f32 %v786, %v787
    %v789 = vsel %vm41, %v766, 0.0
    %v790 = vadd.f32 %v788, %v789
    %v791 = vsel %vm41, %v767, 0.0
    %v792 = vadd.f32 %v790, %v791
    %v793 = vsel %vm41, %v768, 0.0
    %v794 = vadd.f32 %v792, %v793
    %v795 = vsel %vm41, %v769, 0.0
    %v796 = vadd.f32 %v794, %v795
    %v797 = vsel %vm41, %v770, 0.0
    %v798 = vadd.f32 %v796, %v797
    %v799 = vsel %vm41, %v771, 0.0
    %v800 = vadd.f32 %v798, %v799
    %v801 = vsel %vm41, %v772, 0.0
    %v802 = vadd.f32 %v800, %v801
    %v803 = vsel %vm41, %v773, 0.0
    %v804 = vadd.f32 %v802, %v803
    %805 = vadd.xlane.f32.xlu0 %v804
    %v806 = vpop.xlane.xlu0 %805
    %v807 = vrot.slane %v806, 4
    %v808 = vadd.f32 %v806, %v807
    %v809 = vrot.slane %v808, 2
    %v810 = vadd.f32 %v808, %v809
    %v811 = vrot.slane %v810, 1
    %v812 = vadd.f32 %v810, %v811
    %s813 = vtos %v812
    %v814 = vstv %s813
    %vm815 = vcmask 0
    %816 = vst.msk [vmem:[#allocation2] sm:$0x1] %vm815, %v814
    // Predicated region
    $region18: #{tpu_custom_call.1} parent=1 // pred_check
      _
    $region19: #{tpu_custom_call.1} parent=1 // pred_check_branch
      %818 = sbr.rel (0) target = $region21
    $region20: #{tpu_custom_call.1} parent=1 // pred_region
      _
    $region21: #{tpu_custom_call.1} parent=1 // pred_fallthru
      _
    // Predicated region
    $region22: #{tpu_custom_call.1} parent=1 // pred_check
      _
    $region23: #{tpu_custom_call.1} parent=1 // pred_check_branch
      %820 = sbr.rel (0) target = $region25
    $region24: #{tpu_custom_call.1} parent=1 // pred_region
      _
    $region25: #{tpu_custom_call.1} parent=1 // pred_fallthru
      _
    // Predicated region
    $region26: #{tpu_custom_call.1} parent=1 // pred_check
      _
    $region27: #{tpu_custom_call.1} parent=1 // pred_check_branch
      %822 = sbr.rel (0) target = $region29
    $region28: #{tpu_custom_call.1} parent=1 // pred_region
      %824 = vsyncadd [#allocation3], 0
      %s826 = sshll.u32 [#allocation2], 4
      %s827 = int_to_ptr.vmem [resolvable:$true] %s826
      %s828 = sshll.u32 %s6, 4
      %s829 = int_to_ptr.hbm [resolvable:$true] %s828
      %831 = dma.vmem_to_hbm [thread:$0]  %s827, 16, %s829, [#allocation3]
    $region29: #{tpu_custom_call.1} parent=1 // pred_fallthru
      _
    // Predicated region
    $region30: #{tpu_custom_call.1} parent=1 // pred_check
      _
    $region31: #{tpu_custom_call.1} parent=1 // pred_check_branch
      %833 = sbr.rel (0) target = $region33
    $region32: #{tpu_custom_call.1} parent=1 // pred_region
      _
    $region33: #{tpu_custom_call.1} parent=1 // pred_fallthru
      _
    // Predicated region
    $region34: #{tpu_custom_call.1} parent=1 // pred_check
      _
    $region35: #{tpu_custom_call.1} parent=1 // pred_check_branch
      %835 = sbr.rel (0) target = $region37
    $region36: #{tpu_custom_call.1} parent=1 // pred_region
      _
    $region37: #{tpu_custom_call.1} parent=1 // pred_fallthru
      _
    // Predicated region
    $region38: #{tpu_custom_call.1} parent=1 // pred_check
      _
    $region39: #{tpu_custom_call.1} parent=1 // pred_check_branch
      %837 = sbr.rel (0) target = $region41
    $region40: #{tpu_custom_call.1} parent=1 // pred_region
      %839 = dma.done [#allocation3], 16
    $region41: #{tpu_custom_call.1} parent=1 // pred_fallthru
      _
    %840 = vsyncpa [#allocation3], 1

// kernel: tpu_custom_call.1
$region0: #{tpu_custom_call.1}
  #allocation0 [shape = 'u32[]', space=smem, size = 0x4, offset = 0x4, fixed_abs, tag = 'smem constant byte address 0x4 - core index']
  #allocation1 [shape = 'u32[72,128]{1,0:T(1,128)}', space=vmem, size = 0x9000, scoped, tag = 'internal scratch']
  %s0 = inlined_call_operand.vmem [shape: f32[128,32], index: 0, kind: input, shape index: {}]
  %s1 = inlined_call_operand.vmem [shape: f32[32,128], index: 1, kind: input, shape index: {}]
  %s2 = inlined_call_operand.vmem [shape: f32[128,32], index: 2, kind: input, shape index: {}]
  %s3 = inlined_call_operand.vmem [shape: f32[1,128], index: 3, kind: input, shape index: {}]
  %s4 = inlined_call_operand.vmem [shape: f32[128,32], index: 4, kind: output, shape index: {0}]
  %s5 = inlined_call_operand.vmem [shape: s32[128,1], index: 5, kind: output, shape index: {1}]
  %s6 = inlined_call_operand.hbm [shape: f32[1,1,1], index: 6, kind: output, shape index: {2}]
  %7 = xla_tuple %s4, %s5, %s6
  %s8 = sld [smem:[#allocation0]]
  $region42: #{tpu_custom_call.1} parent=0
    _
  %s10 = ssub.s32 1, %s8
  %s11 = scalar_select 0, %s10, %s8
  $region1: #{tpu_custom_call.1} parent=0
    #allocation2 [shape = 'u8[512]{0}', space=vmem, size = 0x400, scoped, tag = 'output window, operand 2, single buffered']
    #allocation3 [shape = 's32[1]{0}', space=sflag, size = 0x4, scoped, tag = 'scoped memory for tpu_custom_call.1']
    %12 = vsyncpa [#allocation3], 0
    // Predicated region
    $region2: #{tpu_custom_call.1} parent=1 // pred_check
      _
    $region3: #{tpu_custom_call.1} parent=1 // pred_check_branch
      %14 = sbr.rel (0) target = $region5
    $region4: #{tpu_custom_call.1} parent=1 // pred_region
      _
    $region5: #{tpu_custom_call.1} parent=1 // pred_fallthru
      _
    // Predicated region
    $region6: #{tpu_custom_call.1} parent=1 // pred_check
      _
    $region7: #{tpu_custom_call.1} parent=1 // pred_check_branch
      %16 = sbr.rel (0) target = $region9
    $region8: #{tpu_custom_call.1} parent=1 // pred_region
      _
    $region9: #{tpu_custom_call.1} parent=1 // pred_fallthru
      _
    // Predicated region
    $region10: #{tpu_custom_call.1} parent=1 // pred_check
      _
    $region11: #{tpu_custom_call.1} parent=1 // pred_check_branch
      %18 = sbr.rel (0) target = $region13
    $region12: #{tpu_custom_call.1} parent=1 // pred_region
      _
    $region13: #{tpu_custom_call.1} parent=1 // pred_fallthru
      _
    // Predicated region
    $region14: #{tpu_custom_call.1} parent=1 // pred_check
      _
    $region15: #{tpu_custom_call.1} parent=1 // pred_check_branch
      %20 = sbr.rel (0) target = $region17
    $region16: #{tpu_custom_call.1} parent=1 // pred_region
      _
    $region17: #{tpu_custom_call.1} parent=1 // pred_fallthru
      _
    %v21 = vld [vmem:[%s0] sm:$0xff]
    %v22 = vld [vmem:[%s0 + $0x8] sm:$0xff]
    %v23 = vld [vmem:[%s0 + $0x10] sm:$0xff]
    %v24 = vld [vmem:[%s0 + $0x18] sm:$0xff]
    %v25 = vld [vmem:[%s0 + $0x20] sm:$0xff]
    %v26 = vld [vmem:[%s0 + $0x28] sm:$0xff]
    %v27 = vld [vmem:[%s0 + $0x30] sm:$0xff]
    %v28 = vld [vmem:[%s0 + $0x38] sm:$0xff]
    %v29 = vld [vmem:[%s0 + $0x40] sm:$0xff]
    %v30 = vld [vmem:[%s0 + $0x48] sm:$0xff]
    %v31 = vld [vmem:[%s0 + $0x50] sm:$0xff]
    %v32 = vld [vmem:[%s0 + $0x58] sm:$0xff]
    %v33 = vld [vmem:[%s0 + $0x60] sm:$0xff]
    %v34 = vld [vmem:[%s0 + $0x68] sm:$0xff]
    %v35 = vld [vmem:[%s0 + $0x70] sm:$0xff]
    %v36 = vld [vmem:[%s0 + $0x78] sm:$0xff]
    %v37 = vld [vmem:[%s1] sm:$0xff]
    %v38 = vld [vmem:[%s1 + $0x8] sm:$0xff]
    %v39 = vld [vmem:[%s1 + $0x10] sm:$0xff]
    %v40 = vld [vmem:[%s1 + $0x18] sm:$0xff]
    %vm41 = vcmask 261120
    %v43 = vsel %vm41, %v21, 0
    %v46 = vsel %vm41, %v22, 0
    %v49 = vsel %vm41, %v23, 0
    %v52 = vsel %vm41, %v24, 0
    %v55 = vsel %vm41, %v25, 0
    %v58 = vsel %vm41, %v26, 0
    %v61 = vsel %vm41, %v27, 0
    %v64 = vsel %vm41, %v28, 0
    %v67 = vsel %vm41, %v29, 0
    %v70 = vsel %vm41, %v30, 0
    %v73 = vsel %vm41, %v31, 0
    %v76 = vsel %vm41, %v32, 0
    %v79 = vsel %vm41, %v33, 0
    %v82 = vsel %vm41, %v34, 0
    %v85 = vsel %vm41, %v35, 0
    %v88 = vsel %vm41, %v36, 0
    %90 = vmatpush.msra.mxu0 0.0
    %91 = vmatpush.msra.mxu0 0.0
    %92 = vmatpush.msra.mxu0 0.0
    %93 = vmatpush.msra.mxu0 0.0
    %94 = vmatpush.msra.mxu0 0.0
    %95 = vmatpush.msra.mxu0 0.0
    %96 = vmatpush.msra.mxu0 0.0
    %97 = vmatpush.msra.mxu0 0.0
    %98 = vmatpush.msra.mxu0 0.0
    %99 = vmatpush.msra.mxu0 0.0
    %100 = vmatpush.msra.mxu0 0.0
    %101 = vmatpush.msra.mxu0 0.0
    %102 = vmatpush.msra.mxu0 %v40
    %103 = vmatpush.msra.mxu0 %v39
    %104 = vmatpush.msra.mxu0 %v38
    %105 = vmatpush.msra.mxu0 %v37
    %106 = vmatmul.f32.gmra.mxu0 %v43
    %v107 = vpop.f32.mrf.mxu0
    %v108 = vadd.f32 0.0, %v107
    %109 = vmatmul.f32.gmra.mxu0 %v46
    %v110 = vpop.f32.mrf.mxu0
    %v111 = vadd.f32 0.0, %v110
    %112 = vmatmul.f32.gmra.mxu0 %v49
    %v113 = vpop.f32.mrf.mxu0
    %v114 = vadd.f32 0.0, %v113
    %115 = vmatmul.f32.gmra.mxu0 %v52
    %v116 = vpop.f32.mrf.mxu0
    %v117 = vadd.f32 0.0, %v116
    %118 = vmatmul.f32.gmra.mxu0 %v55
    %v119 = vpop.f32.mrf.mxu0
    %v120 = vadd.f32 0.0, %v119
    %121 = vmatmul.f32.gmra.mxu0 %v58
    %v122 = vpop.f32.mrf.mxu0
    %v123 = vadd.f32 0.0, %v122
    %124 = vmatmul.f32.gmra.mxu0 %v61
    %v125 = vpop.f32.mrf.mxu0
    %v126 = vadd.f32 0.0, %v125
    %127 = vmatmul.f32.gmra.mxu0 %v64
    %v128 = vpop.f32.mrf.mxu0
    %v129 = vadd.f32 0.0, %v128
    %130 = vmatmul.f32.gmra.mxu0 %v67
    %v131 = vpop.f32.mrf.mxu0
    %v132 = vadd.f32 0.0, %v131
    %133 = vmatmul.f32.gmra.mxu0 %v70
    %v134 = vpop.f32.mrf.mxu0
    %v135 = vadd.f32 0.0, %v134
    %136 = vmatmul.f32.gmra.mxu0 %v73
    %v137 = vpop.f32.mrf.mxu0
    %v138 = vadd.f32 0.0, %v137
    %139 = vmatmul.f32.gmra.mxu0 %v76
    %v140 = vpop.f32.mrf.mxu0
    %v141 = vadd.f32 0.0, %v140
    %142 = vmatmul.f32.gmra.mxu0 %v79
    %v143 = vpop.f32.mrf.mxu0
    %v144 = vadd.f32 0.0, %v143
    %145 = vmatmul.f32.gmra.mxu0 %v82
    %v146 = vpop.f32.mrf.mxu0
    %v147 = vadd.f32 0.0, %v146
    %148 = vmatmul.f32.gmra.mxu0 %v85
    %v149 = vpop.f32.mrf.mxu0
    %v150 = vadd.f32 0.0, %v149
    %151 = vmatmul.f32.gmra.mxu0 %v88
    %v152 = vpop.f32.mrf.mxu0
    %v153 = vadd.f32 0.0, %v152
    %154 = vdwg.mxu0
    %v155 = vld [vmem:[%s3] sm:$0x1]
    %v156 = vmul.f32 %v108, 2.0
    %v157 = vmul.f32 %v111, 2.0
    %v158 = vmul.f32 %v114, 2.0
    %v159 = vmul.f32 %v117, 2.0
    %v160 = vmul.f32 %v120, 2.0
    %v161 = vmul.f32 %v123, 2.0
    %v162 = vmul.f32 %v126, 2.0
    %v163 = vmul.f32 %v129, 2.0
    %v164 = vmul.f32 %v132, 2.0
    %v165 = vmul.f32 %v135, 2.0
    %v166 = vmul.f32 %v138, 2.0
    %v167 = vmul.f32 %v141, 2.0
    %v168 = vmul.f32 %v144, 2.0
    %v169 = vmul.f32 %v147, 2.0
    %v170 = vmul.f32 %v150, 2.0
    %v171 = vmul.f32 %v153, 2.0
    %v173 = vperm.slane %v155, 0
    %v175 = vsub.f32 %v173, %v156
    %v176 = vsub.f32 %v173, %v157
    %v177 = vsub.f32 %v173, %v158
    %v178 = vsub.f32 %v173, %v159
    %v179 = vsub.f32 %v173, %v160
    %v180 = vsub.f32 %v173, %v161
    %v181 = vsub.f32 %v173, %v162
    %v182 = vsub.f32 %v173, %v163
    %v183 = vsub.f32 %v173, %v164
    %v184 = vsub.f32 %v173, %v165
    %v185 = vsub.f32 %v173, %v166
    %v186 = vsub.f32 %v173, %v167
    %v187 = vsub.f32 %v173, %v168
    %v188 = vsub.f32 %v173, %v169
    %v189 = vsub.f32 %v173, %v170
    %v190 = vsub.f32 %v173, %v171
    %v191 = vlaneseq
    %v192 = vand.u32 %v191, 127
    %193 = vmin.xlane.f32.xlu0 %v175
    %v194 = vpop.xlane.xlu0 %193
    %195 = vmin.xlane.f32.xlu0 %v176
    %v196 = vpop.xlane.xlu0 %195
    %197 = vmin.xlane.f32.xlu0 %v177
    %v198 = vpop.xlane.xlu0 %197
    %199 = vmin.xlane.f32.xlu0 %v178
    %v200 = vpop.xlane.xlu0 %199
    %201 = vmin.xlane.f32.xlu0 %v179
    %v202 = vpop.xlane.xlu0 %201
    %203 = vmin.xlane.f32.xlu0 %v180
    %v204 = vpop.xlane.xlu0 %203
    %205 = vmin.xlane.f32.xlu0 %v181
    %v206 = vpop.xlane.xlu0 %205
    %207 = vmin.xlane.f32.xlu0 %v182
    %v208 = vpop.xlane.xlu0 %207
    %209 = vmin.xlane.f32.xlu0 %v183
    %v210 = vpop.xlane.xlu0 %209
    %211 = vmin.xlane.f32.xlu0 %v184
    %v212 = vpop.xlane.xlu0 %211
    %213 = vmin.xlane.f32.xlu0 %v185
    %v214 = vpop.xlane.xlu0 %213
    %215 = vmin.xlane.f32.xlu0 %v186
    %v216 = vpop.xlane.xlu0 %215
    %217 = vmin.xlane.f32.xlu0 %v187
    %v218 = vpop.xlane.xlu0 %217
    %219 = vmin.xlane.f32.xlu0 %v188
    %v220 = vpop.xlane.xlu0 %219
    %221 = vmin.xlane.f32.xlu0 %v189
    %v222 = vpop.xlane.xlu0 %221
    %223 = vmin.xlane.f32.xlu0 %v190
    %v224 = vpop.xlane.xlu0 %223
    %vm225 = vcmp.eq.f32.partialorder %v175, %v194
    %vm226 = vcmp.eq.f32.partialorder %v176, %v196
    %vm227 = vcmp.eq.f32.partialorder %v177, %v198
    %vm228 = vcmp.eq.f32.partialorder %v178, %v200
    %vm229 = vcmp.eq.f32.partialorder %v179, %v202
    %vm230 = vcmp.eq.f32.partialorder %v180, %v204
    %vm231 = vcmp.eq.f32.partialorder %v181, %v206
    %vm232 = vcmp.eq.f32.partialorder %v182, %v208
    %vm233 = vcmp.eq.f32.partialorder %v183, %v210
    %vm234 = vcmp.eq.f32.partialorder %v184, %v212
    %vm235 = vcmp.eq.f32.partialorder %v185, %v214
    %vm236 = vcmp.eq.f32.partialorder %v186, %v216
    %vm237 = vcmp.eq.f32.partialorder %v187, %v218
    %vm238 = vcmp.eq.f32.partialorder %v188, %v220
    %vm239 = vcmp.eq.f32.partialorder %v189, %v222
    %vm240 = vcmp.eq.f32.partialorder %v190, %v224
    %v241 = vsel %vm225, %v192, 128
    %v242 = vsel %vm226, %v192, 128
    %v243 = vsel %vm227, %v192, 128
    %v244 = vsel %vm228, %v192, 128
    %v245 = vsel %vm229, %v192, 128
    %v246 = vsel %vm230, %v192, 128
    %v247 = vsel %vm231, %v192, 128
    %v248 = vsel %vm232, %v192, 128
    %v249 = vsel %vm233, %v192, 128
    %v250 = vsel %vm234, %v192, 128
    %v251 = vsel %vm235, %v192, 128
    %v252 = vsel %vm236, %v192, 128
    %v253 = vsel %vm237, %v192, 128
    %v254 = vsel %vm238, %v192, 128
    %v255 = vsel %vm239, %v192, 128
    %v256 = vsel %vm240, %v192, 128
    %v257 = vand.u32 %v241, 65535
    %v258 = vshra.s32 %v241, 16
    %v259 = vcvt.s32.f32 %v257
    %v260 = vcvt.s32.f32 %v258
    %261 = vmin.xlane.f32.xlu0 %v260
    %v262 = vpop.xlane.xlu0 %261
    %vm263 = vcmp.eq.f32.partialorder %v260, %v262
    %v264 = vsel %vm263, %v259, inf
    %265 = vmin.xlane.f32.xlu0 %v264
    %v266 = vpop.xlane.xlu0 %265
    %v267 = vcvt.f32.s32 %v266
    %v268 = vcvt.f32.s32 %v262
    %v269 = vshll.u32 %v268, 16
    %v270 = vadd.s32 %v269, %v267
    %v271 = vand.u32 %v242, 65535
    %v272 = vshra.s32 %v242, 16
    %v273 = vcvt.s32.f32 %v271
    %v274 = vcvt.s32.f32 %v272
    %275 = vmin.xlane.f32.xlu0 %v274
    %v276 = vpop.xlane.xlu0 %275
    %vm277 = vcmp.eq.f32.partialorder %v274, %v276
    %v278 = vsel %vm277, %v273, inf
    %279 = vmin.xlane.f32.xlu0 %v278
    %v280 = vpop.xlane.xlu0 %279
    %v281 = vcvt.f32.s32 %v280
    %v282 = vcvt.f32.s32 %v276
    %v283 = vshll.u32 %v282, 16
    %v284 = vadd.s32 %v283, %v281
    %v285 = vand.u32 %v243, 65535
    %v286 = vshra.s32 %v243, 16
    %v287 = vcvt.s32.f32 %v285
    %v288 = vcvt.s32.f32 %v286
    %289 = vmin.xlane.f32.xlu0 %v288
    %v290 = vpop.xlane.xlu0 %289
    %vm291 = vcmp.eq.f32.partialorder %v288, %v290
    %v292 = vsel %vm291, %v287, inf
    %293 = vmin.xlane.f32.xlu0 %v292
    %v294 = vpop.xlane.xlu0 %293
    %v295 = vcvt.f32.s32 %v294
    %v296 = vcvt.f32.s32 %v290
    %v297 = vshll.u32 %v296, 16
    %v298 = vadd.s32 %v297, %v295
    %v299 = vand.u32 %v244, 65535
    %v300 = vshra.s32 %v244, 16
    %v301 = vcvt.s32.f32 %v299
    %v302 = vcvt.s32.f32 %v300
    %303 = vmin.xlane.f32.xlu0 %v302
    %v304 = vpop.xlane.xlu0 %303
    %vm305 = vcmp.eq.f32.partialorder %v302, %v304
    %v306 = vsel %vm305, %v301, inf
    %307 = vmin.xlane.f32.xlu0 %v306
    %v308 = vpop.xlane.xlu0 %307
    %v309 = vcvt.f32.s32 %v308
    %v310 = vcvt.f32.s32 %v304
    %v311 = vshll.u32 %v310, 16
    %v312 = vadd.s32 %v311, %v309
    %v313 = vand.u32 %v245, 65535
    %v314 = vshra.s32 %v245, 16
    %v315 = vcvt.s32.f32 %v313
    %v316 = vcvt.s32.f32 %v314
    %317 = vmin.xlane.f32.xlu0 %v316
    %v318 = vpop.xlane.xlu0 %317
    %vm319 = vcmp.eq.f32.partialorder %v316, %v318
    %v320 = vsel %vm319, %v315, inf
    %321 = vmin.xlane.f32.xlu0 %v320
    %v322 = vpop.xlane.xlu0 %321
    %v323 = vcvt.f32.s32 %v322
    %v324 = vcvt.f32.s32 %v318
    %v325 = vshll.u32 %v324, 16
    %v326 = vadd.s32 %v325, %v323
    %v327 = vand.u32 %v246, 65535
    %v328 = vshra.s32 %v246, 16
    %v329 = vcvt.s32.f32 %v327
    %v330 = vcvt.s32.f32 %v328
    %331 = vmin.xlane.f32.xlu0 %v330
    %v332 = vpop.xlane.xlu0 %331
    %vm333 = vcmp.eq.f32.partialorder %v330, %v332
    %v334 = vsel %vm333, %v329, inf
    %335 = vmin.xlane.f32.xlu0 %v334
    %v336 = vpop.xlane.xlu0 %335
    %v337 = vcvt.f32.s32 %v336
    %v338 = vcvt.f32.s32 %v332
    %v339 = vshll.u32 %v338, 16
    %v340 = vadd.s32 %v339, %v337
    %v341 = vand.u32 %v247, 65535
    %v342 = vshra.s32 %v247, 16
    %v343 = vcvt.s32.f32 %v341
    %v344 = vcvt.s32.f32 %v342
    %345 = vmin.xlane.f32.xlu0 %v344
    %v346 = vpop.xlane.xlu0 %345
    %vm347 = vcmp.eq.f32.partialorder %v344, %v346
    %v348 = vsel %vm347, %v343, inf
    %349 = vmin.xlane.f32.xlu0 %v348
    %v350 = vpop.xlane.xlu0 %349
    %v351 = vcvt.f32.s32 %v350
    %v352 = vcvt.f32.s32 %v346
    %v353 = vshll.u32 %v352, 16
    %v354 = vadd.s32 %v353, %v351
    %v355 = vand.u32 %v248, 65535
    %v356 = vshra.s32 %v248, 16
    %v357 = vcvt.s32.f32 %v355
    %v358 = vcvt.s32.f32 %v356
    %359 = vmin.xlane.f32.xlu0 %v358
    %v360 = vpop.xlane.xlu0 %359
    %vm361 = vcmp.eq.f32.partialorder %v358, %v360
    %v362 = vsel %vm361, %v357, inf
    %363 = vmin.xlane.f32.xlu0 %v362
    %v364 = vpop.xlane.xlu0 %363
    %v365 = vcvt.f32.s32 %v364
    %v366 = vcvt.f32.s32 %v360
    %v367 = vshll.u32 %v366, 16
    %v368 = vadd.s32 %v367, %v365
    %v369 = vand.u32 %v249, 65535
    %v370 = vshra.s32 %v249, 16
    %v371 = vcvt.s32.f32 %v369
    %v372 = vcvt.s32.f32 %v370
    %373 = vmin.xlane.f32.xlu0 %v372
    %v374 = vpop.xlane.xlu0 %373
    %vm375 = vcmp.eq.f32.partialorder %v372, %v374
    %v376 = vsel %vm375, %v371, inf
    %377 = vmin.xlane.f32.xlu0 %v376
    %v378 = vpop.xlane.xlu0 %377
    %v379 = vcvt.f32.s32 %v378
    %v380 = vcvt.f32.s32 %v374
    %v381 = vshll.u32 %v380, 16
    %v382 = vadd.s32 %v381, %v379
    %v383 = vand.u32 %v250, 65535
    %v384 = vshra.s32 %v250, 16
    %v385 = vcvt.s32.f32 %v383
    %v386 = vcvt.s32.f32 %v384
    %387 = vmin.xlane.f32.xlu0 %v386
    %v388 = vpop.xlane.xlu0 %387
    %vm389 = vcmp.eq.f32.partialorder %v386, %v388
    %v390 = vsel %vm389, %v385, inf
    %391 = vmin.xlane.f32.xlu0 %v390
    %v392 = vpop.xlane.xlu0 %391
    %v393 = vcvt.f32.s32 %v392
    %v394 = vcvt.f32.s32 %v388
    %v395 = vshll.u32 %v394, 16
    %v396 = vadd.s32 %v395, %v393
    %v397 = vand.u32 %v251, 65535
    %v398 = vshra.s32 %v251, 16
    %v399 = vcvt.s32.f32 %v397
    %v400 = vcvt.s32.f32 %v398
    %401 = vmin.xlane.f32.xlu0 %v400
    %v402 = vpop.xlane.xlu0 %401
    %vm403 = vcmp.eq.f32.partialorder %v400, %v402
    %v404 = vsel %vm403, %v399, inf
    %405 = vmin.xlane.f32.xlu0 %v404
    %v406 = vpop.xlane.xlu0 %405
    %v407 = vcvt.f32.s32 %v406
    %v408 = vcvt.f32.s32 %v402
    %v409 = vshll.u32 %v408, 16
    %v410 = vadd.s32 %v409, %v407
    %v411 = vand.u32 %v252, 65535
    %v412 = vshra.s32 %v252, 16
    %v413 = vcvt.s32.f32 %v411
    %v414 = vcvt.s32.f32 %v412
    %415 = vmin.xlane.f32.xlu0 %v414
    %v416 = vpop.xlane.xlu0 %415
    %vm417 = vcmp.eq.f32.partialorder %v414, %v416
    %v418 = vsel %vm417, %v413, inf
    %419 = vmin.xlane.f32.xlu0 %v418
    %v420 = vpop.xlane.xlu0 %419
    %v421 = vcvt.f32.s32 %v420
    %v422 = vcvt.f32.s32 %v416
    %v423 = vshll.u32 %v422, 16
    %v424 = vadd.s32 %v423, %v421
    %v425 = vand.u32 %v253, 65535
    %v426 = vshra.s32 %v253, 16
    %v427 = vcvt.s32.f32 %v425
    %v428 = vcvt.s32.f32 %v426
    %429 = vmin.xlane.f32.xlu0 %v428
    %v430 = vpop.xlane.xlu0 %429
    %vm431 = vcmp.eq.f32.partialorder %v428, %v430
    %v432 = vsel %vm431, %v427, inf
    %433 = vmin.xlane.f32.xlu0 %v432
    %v434 = vpop.xlane.xlu0 %433
    %v435 = vcvt.f32.s32 %v434
    %v436 = vcvt.f32.s32 %v430
    %v437 = vshll.u32 %v436, 16
    %v438 = vadd.s32 %v437, %v435
    %v439 = vand.u32 %v254, 65535
    %v440 = vshra.s32 %v254, 16
    %v441 = vcvt.s32.f32 %v439
    %v442 = vcvt.s32.f32 %v440
    %443 = vmin.xlane.f32.xlu0 %v442
    %v444 = vpop.xlane.xlu0 %443
    %vm445 = vcmp.eq.f32.partialorder %v442, %v444
    %v446 = vsel %vm445, %v441, inf
    %447 = vmin.xlane.f32.xlu0 %v446
    %v448 = vpop.xlane.xlu0 %447
    %v449 = vcvt.f32.s32 %v448
    %v450 = vcvt.f32.s32 %v444
    %v451 = vshll.u32 %v450, 16
    %v452 = vadd.s32 %v451, %v449
    %v453 = vand.u32 %v255, 65535
    %v454 = vshra.s32 %v255, 16
    %v455 = vcvt.s32.f32 %v453
    %v456 = vcvt.s32.f32 %v454
    %457 = vmin.xlane.f32.xlu0 %v456
    %v458 = vpop.xlane.xlu0 %457
    %vm459 = vcmp.eq.f32.partialorder %v456, %v458
    %v460 = vsel %vm459, %v455, inf
    %461 = vmin.xlane.f32.xlu0 %v460
    %v462 = vpop.xlane.xlu0 %461
    %v463 = vcvt.f32.s32 %v462
    %v464 = vcvt.f32.s32 %v458
    %v465 = vshll.u32 %v464, 16
    %v466 = vadd.s32 %v465, %v463
    %v467 = vand.u32 %v256, 65535
    %v468 = vshra.s32 %v256, 16
    %v469 = vcvt.s32.f32 %v467
    %v470 = vcvt.s32.f32 %v468
    %471 = vmin.xlane.f32.xlu0 %v470
    %v472 = vpop.xlane.xlu0 %471
    %vm473 = vcmp.eq.f32.partialorder %v470, %v472
    %v474 = vsel %vm473, %v469, inf
    %475 = vmin.xlane.f32.xlu0 %v474
    %v476 = vpop.xlane.xlu0 %475
    %v477 = vcvt.f32.s32 %v476
    %v478 = vcvt.f32.s32 %v472
    %v479 = vshll.u32 %v478, 16
    %v480 = vadd.s32 %v479, %v477
    %vm481 = vcmp.eq.s32.totalorder %v192, %v270
    %vm482 = vcmp.eq.s32.totalorder %v192, %v284
    %vm483 = vcmp.eq.s32.totalorder %v192, %v298
    %vm484 = vcmp.eq.s32.totalorder %v192, %v312
    %vm485 = vcmp.eq.s32.totalorder %v192, %v326
    %vm486 = vcmp.eq.s32.totalorder %v192, %v340
    %vm487 = vcmp.eq.s32.totalorder %v192, %v354
    %vm488 = vcmp.eq.s32.totalorder %v192, %v368
    %vm489 = vcmp.eq.s32.totalorder %v192, %v382
    %vm490 = vcmp.eq.s32.totalorder %v192, %v396
    %vm491 = vcmp.eq.s32.totalorder %v192, %v410
    %vm492 = vcmp.eq.s32.totalorder %v192, %v424
    %vm493 = vcmp.eq.s32.totalorder %v192, %v438
    %vm494 = vcmp.eq.s32.totalorder %v192, %v452
    %vm495 = vcmp.eq.s32.totalorder %v192, %v466
    %vm496 = vcmp.eq.s32.totalorder %v192, %v480
    %v497 = vsel %vm481, 1, 0
    %v498 = vsel %vm482, 1, 0
    %v499 = vsel %vm483, 1, 0
    %v500 = vsel %vm484, 1, 0
    %v501 = vsel %vm485, 1, 0
    %v502 = vsel %vm486, 1, 0
    %v503 = vsel %vm487, 1, 0
    %v504 = vsel %vm488, 1, 0
    %v505 = vsel %vm489, 1, 0
    %v506 = vsel %vm490, 1, 0
    %v507 = vsel %vm491, 1, 0
    %v508 = vsel %vm492, 1, 0
    %v509 = vsel %vm493, 1, 0
    %v510 = vsel %vm494, 1, 0
    %v511 = vsel %vm495, 1, 0
    %v512 = vsel %vm496, 1, 0
    %v513 = vcvt.s32.f32 %v497
    %v514 = vcvt.s32.f32 %v498
    %v515 = vcvt.s32.f32 %v499
    %v516 = vcvt.s32.f32 %v500
    %v517 = vcvt.s32.f32 %v501
    %v518 = vcvt.s32.f32 %v502
    %v519 = vcvt.s32.f32 %v503
    %v520 = vcvt.s32.f32 %v504
    %v521 = vcvt.s32.f32 %v505
    %v522 = vcvt.s32.f32 %v506
    %v523 = vcvt.s32.f32 %v507
    %v524 = vcvt.s32.f32 %v508
    %v525 = vcvt.s32.f32 %v509
    %v526 = vcvt.s32.f32 %v510
    %v527 = vcvt.s32.f32 %v511
    %v528 = vcvt.s32.f32 %v512
    %v529 = vld [vmem:[%s2] sm:$0xff]
    %v530 = vld [vmem:[%s2 + $0x8] sm:$0xff]
    %v531 = vld [vmem:[%s2 + $0x10] sm:$0xff]
    %v532 = vld [vmem:[%s2 + $0x18] sm:$0xff]
    %v533 = vld [vmem:[%s2 + $0x20] sm:$0xff]
    %v534 = vld [vmem:[%s2 + $0x28] sm:$0xff]
    %v535 = vld [vmem:[%s2 + $0x30] sm:$0xff]
    %v536 = vld [vmem:[%s2 + $0x38] sm:$0xff]
    %v537 = vld [vmem:[%s2 + $0x40] sm:$0xff]
    %v538 = vld [vmem:[%s2 + $0x48] sm:$0xff]
    %v539 = vld [vmem:[%s2 + $0x50] sm:$0xff]
    %v540 = vld [vmem:[%s2 + $0x58] sm:$0xff]
    %v541 = vld [vmem:[%s2 + $0x60] sm:$0xff]
    %v542 = vld [vmem:[%s2 + $0x68] sm:$0xff]
    %v543 = vld [vmem:[%s2 + $0x70] sm:$0xff]
    %v544 = vld [vmem:[%s2 + $0x78] sm:$0xff]
    %545 = vmatpush.msra.mxu0 %v544
    %546 = vmatpush.msra.mxu0 %v543
    %547 = vmatpush.msra.mxu0 %v542
    %548 = vmatpush.msra.mxu0 %v541
    %549 = vmatpush.msra.mxu0 %v540
    %550 = vmatpush.msra.mxu0 %v539
    %551 = vmatpush.msra.mxu0 %v538
    %552 = vmatpush.msra.mxu0 %v537
    %553 = vmatpush.msra.mxu0 %v536
    %554 = vmatpush.msra.mxu0 %v535
    %555 = vmatpush.msra.mxu0 %v534
    %556 = vmatpush.msra.mxu0 %v533
    %557 = vmatpush.msra.mxu0 %v532
    %558 = vmatpush.msra.mxu0 %v531
    %559 = vmatpush.msra.mxu0 %v530
    %560 = vmatpush.msra.mxu0 %v529
    %561 = vmatmul.f32.gmra.mxu0 %v513
    %v562 = vpop.f32.mrf.mxu0
    %v563 = vadd.f32 0.0, %v562
    %564 = vmatmul.f32.gmra.mxu0 %v514
    %v565 = vpop.f32.mrf.mxu0
    %v566 = vadd.f32 0.0, %v565
    %567 = vmatmul.f32.gmra.mxu0 %v515
    %v568 = vpop.f32.mrf.mxu0
    %v569 = vadd.f32 0.0, %v568
    %570 = vmatmul.f32.gmra.mxu0 %v516
    %v571 = vpop.f32.mrf.mxu0
    %v572 = vadd.f32 0.0, %v571
    %573 = vmatmul.f32.gmra.mxu0 %v517
    %v574 = vpop.f32.mrf.mxu0
    %v575 = vadd.f32 0.0, %v574
    %576 = vmatmul.f32.gmra.mxu0 %v518
    %v577 = vpop.f32.mrf.mxu0
    %v578 = vadd.f32 0.0, %v577
    %579 = vmatmul.f32.gmra.mxu0 %v519
    %v580 = vpop.f32.mrf.mxu0
    %v581 = vadd.f32 0.0, %v580
    %582 = vmatmul.f32.gmra.mxu0 %v520
    %v583 = vpop.f32.mrf.mxu0
    %v584 = vadd.f32 0.0, %v583
    %585 = vmatmul.f32.gmra.mxu0 %v521
    %v586 = vpop.f32.mrf.mxu0
    %v587 = vadd.f32 0.0, %v586
    %588 = vmatmul.f32.gmra.mxu0 %v522
    %v589 = vpop.f32.mrf.mxu0
    %v590 = vadd.f32 0.0, %v589
    %591 = vmatmul.f32.gmra.mxu0 %v523
    %v592 = vpop.f32.mrf.mxu0
    %v593 = vadd.f32 0.0, %v592
    %594 = vmatmul.f32.gmra.mxu0 %v524
    %v595 = vpop.f32.mrf.mxu0
    %v596 = vadd.f32 0.0, %v595
    %597 = vmatmul.f32.gmra.mxu0 %v525
    %v598 = vpop.f32.mrf.mxu0
    %v599 = vadd.f32 0.0, %v598
    %600 = vmatmul.f32.gmra.mxu0 %v526
    %v601 = vpop.f32.mrf.mxu0
    %v602 = vadd.f32 0.0, %v601
    %603 = vmatmul.f32.gmra.mxu0 %v527
    %v604 = vpop.f32.mrf.mxu0
    %v605 = vadd.f32 0.0, %v604
    %606 = vmatmul.f32.gmra.mxu0 %v528
    %v607 = vpop.f32.mrf.mxu0
    %v608 = vadd.f32 0.0, %v607
    %609 = vdwg.mxu0
    %vm610 = vcmask 7168
    %611 = vst.msk [vmem:[%s5] sm:$0xff] %vm610, %v270
    %612 = vst.msk [vmem:[%s5 + $0x8] sm:$0xff] %vm610, %v284
    %613 = vst.msk [vmem:[%s5 + $0x10] sm:$0xff] %vm610, %v298
    %614 = vst.msk [vmem:[%s5 + $0x18] sm:$0xff] %vm610, %v312
    %615 = vst.msk [vmem:[%s5 + $0x20] sm:$0xff] %vm610, %v326
    %616 = vst.msk [vmem:[%s5 + $0x28] sm:$0xff] %vm610, %v340
    %617 = vst.msk [vmem:[%s5 + $0x30] sm:$0xff] %vm610, %v354
    %618 = vst.msk [vmem:[%s5 + $0x38] sm:$0xff] %vm610, %v368
    %619 = vst.msk [vmem:[%s5 + $0x40] sm:$0xff] %vm610, %v382
    %620 = vst.msk [vmem:[%s5 + $0x48] sm:$0xff] %vm610, %v396
    %621 = vst.msk [vmem:[%s5 + $0x50] sm:$0xff] %vm610, %v410
    %622 = vst.msk [vmem:[%s5 + $0x58] sm:$0xff] %vm610, %v424
    %623 = vst.msk [vmem:[%s5 + $0x60] sm:$0xff] %vm610, %v438
    %624 = vst.msk [vmem:[%s5 + $0x68] sm:$0xff] %vm610, %v452
    %625 = vst.msk [vmem:[%s5 + $0x70] sm:$0xff] %vm610, %v466
    %626 = vst.msk [vmem:[%s5 + $0x78] sm:$0xff] %vm610, %v480
    %627 = vst.msk [vmem:[%s4] sm:$0xff] %vm41, %v563
    %628 = vst.msk [vmem:[%s4 + $0x8] sm:$0xff] %vm41, %v566
    %629 = vst.msk [vmem:[%s4 + $0x10] sm:$0xff] %vm41, %v569
    %630 = vst.msk [vmem:[%s4 + $0x18] sm:$0xff] %vm41, %v572
    %631 = vst.msk [vmem:[%s4 + $0x20] sm:$0xff] %vm41, %v575
    %632 = vst.msk [vmem:[%s4 + $0x28] sm:$0xff] %vm41, %v578
    %633 = vst.msk [vmem:[%s4 + $0x30] sm:$0xff] %vm41, %v581
    %634 = vst.msk [vmem:[%s4 + $0x38] sm:$0xff] %vm41, %v584
    %635 = vst.msk [vmem:[%s4 + $0x40] sm:$0xff] %vm41, %v587
    %636 = vst.msk [vmem:[%s4 + $0x48] sm:$0xff] %vm41, %v590
    %637 = vst.msk [vmem:[%s4 + $0x50] sm:$0xff] %vm41, %v593
    %638 = vst.msk [vmem:[%s4 + $0x58] sm:$0xff] %vm41, %v596
    %639 = vst.msk [vmem:[%s4 + $0x60] sm:$0xff] %vm41, %v599
    %640 = vst.msk [vmem:[%s4 + $0x68] sm:$0xff] %vm41, %v602
    %641 = vst.msk [vmem:[%s4 + $0x70] sm:$0xff] %vm41, %v605
    %642 = vst.msk [vmem:[%s4 + $0x78] sm:$0xff] %vm41, %v608
    %s643 = smul.u32 0, 128
    %v644 = vlaneseq
    %v645 = vshrl.u32 %v644, 7
    %v646 = vadd.s32 %v645, 8
    %v647 = vadd.s32 %v645, 16
    %v648 = vadd.s32 %v645, 24
    %v649 = vadd.s32 %v645, 32
    %v650 = vadd.s32 %v645, 40
    %v651 = vadd.s32 %v645, 48
    %v652 = vadd.s32 %v645, 56
    %v653 = vadd.s32 %v645, 64
    %v654 = vadd.s32 %v645, 72
    %v655 = vadd.s32 %v645, 80
    %v656 = vadd.s32 %v645, 88
    %v657 = vadd.s32 %v645, 96
    %v658 = vadd.s32 %v645, 104
    %v659 = vadd.s32 %v645, 112
    %v660 = vadd.s32 %v645, 120
    %v661 = vstv %s643
    %v662 = vadd.s32 %v661, %v645
    %v663 = vadd.s32 %v661, %v646
    %v664 = vadd.s32 %v661, %v647
    %v665 = vadd.s32 %v661, %v648
    %v666 = vadd.s32 %v661, %v649
    %v667 = vadd.s32 %v661, %v650
    %v668 = vadd.s32 %v661, %v651
    %v669 = vadd.s32 %v661, %v652
    %v670 = vadd.s32 %v661, %v653
    %v671 = vadd.s32 %v661, %v654
    %v672 = vadd.s32 %v661, %v655
    %v673 = vadd.s32 %v661, %v656
    %v674 = vadd.s32 %v661, %v657
    %v675 = vadd.s32 %v661, %v658
    %v676 = vadd.s32 %v661, %v659
    %v677 = vadd.s32 %v661, %v660
    %vm678 = vcmp.lt.s32.totalorder %v662, 16
    %vm679 = vcmp.lt.s32.totalorder %v663, 16
    %vm680 = vcmp.lt.s32.totalorder %v664, 16
    %vm681 = vcmp.lt.s32.totalorder %v665, 16
    %vm682 = vcmp.lt.s32.totalorder %v666, 16
    %vm683 = vcmp.lt.s32.totalorder %v667, 16
    %vm684 = vcmp.lt.s32.totalorder %v668, 16
    %vm685 = vcmp.lt.s32.totalorder %v669, 16
    %vm686 = vcmp.lt.s32.totalorder %v670, 16
    %vm687 = vcmp.lt.s32.totalorder %v671, 16
    %vm688 = vcmp.lt.s32.totalorder %v672, 16
    %vm689 = vcmp.lt.s32.totalorder %v673, 16
    %vm690 = vcmp.lt.s32.totalorder %v674, 16
    %vm691 = vcmp.lt.s32.totalorder %v675, 16
    %vm692 = vcmp.lt.s32.totalorder %v676, 16
    %vm693 = vcmp.lt.s32.totalorder %v677, 16
    %v694 = vsub.f32 %v21, %v563
    %v695 = vsub.f32 %v22, %v566
    %v696 = vsub.f32 %v23, %v569
    %v697 = vsub.f32 %v24, %v572
    %v698 = vsub.f32 %v25, %v575
    %v699 = vsub.f32 %v26, %v578
    %v700 = vsub.f32 %v27, %v581
    %v701 = vsub.f32 %v28, %v584
    %v702 = vsub.f32 %v29, %v587
    %v703 = vsub.f32 %v30, %v590
    %v704 = vsub.f32 %v31, %v593
    %v705 = vsub.f32 %v32, %v596
    %v706 = vsub.f32 %v33, %v599
    %v707 = vsub.f32 %v34, %v602
    %v708 = vsub.f32 %v35, %v605
    %v709 = vsub.f32 %v36, %v608
    %v710 = vsel %vm678, 1, 0
    %v711 = vsel %vm679, 1, 0
    %v712 = vsel %vm680, 1, 0
    %v713 = vsel %vm681, 1, 0
    %v714 = vsel %vm682, 1, 0
    %v715 = vsel %vm683, 1, 0
    %v716 = vsel %vm684, 1, 0
    %v717 = vsel %vm685, 1, 0
    %v718 = vsel %vm686, 1, 0
    %v719 = vsel %vm687, 1, 0
    %v720 = vsel %vm688, 1, 0
    %v721 = vsel %vm689, 1, 0
    %v722 = vsel %vm690, 1, 0
    %v723 = vsel %vm691, 1, 0
    %v724 = vsel %vm692, 1, 0
    %v725 = vsel %vm693, 1, 0
    %vm726 = vcmp.eq.s32.totalorder %v710, 1
    %vm727 = vcmp.eq.s32.totalorder %v711, 1
    %vm728 = vcmp.eq.s32.totalorder %v712, 1
    %vm729 = vcmp.eq.s32.totalorder %v713, 1
    %vm730 = vcmp.eq.s32.totalorder %v714, 1
    %vm731 = vcmp.eq.s32.totalorder %v715, 1
    %vm732 = vcmp.eq.s32.totalorder %v716, 1
    %vm733 = vcmp.eq.s32.totalorder %v717, 1
    %vm734 = vcmp.eq.s32.totalorder %v718, 1
    %vm735 = vcmp.eq.s32.totalorder %v719, 1
    %vm736 = vcmp.eq.s32.totalorder %v720, 1
    %vm737 = vcmp.eq.s32.totalorder %v721, 1
    %vm738 = vcmp.eq.s32.totalorder %v722, 1
    %vm739 = vcmp.eq.s32.totalorder %v723, 1
    %vm740 = vcmp.eq.s32.totalorder %v724, 1
    %vm741 = vcmp.eq.s32.totalorder %v725, 1
    %v742 = vsel %vm726, %v694, 0.0
    %v743 = vsel %vm727, %v695, 0.0
    %v744 = vsel %vm728, %v696, 0.0
    %v745 = vsel %vm729, %v697, 0.0
    %v746 = vsel %vm730, %v698, 0.0
    %v747 = vsel %vm731, %v699, 0.0
    %v748 = vsel %vm732, %v700, 0.0
    %v749 = vsel %vm733, %v701, 0.0
    %v750 = vsel %vm734, %v702, 0.0
    %v751 = vsel %vm735, %v703, 0.0
    %v752 = vsel %vm736, %v704, 0.0
    %v753 = vsel %vm737, %v705, 0.0
    %v754 = vsel %vm738, %v706, 0.0
    %v755 = vsel %vm739, %v707, 0.0
    %v756 = vsel %vm740, %v708, 0.0
    %v757 = vsel %vm741, %v709, 0.0
    %v758 = vmul.f32 %v742, %v742
    %v759 = vmul.f32 %v743, %v743
    %v760 = vmul.f32 %v744, %v744
    %v761 = vmul.f32 %v745, %v745
    %v762 = vmul.f32 %v746, %v746
    %v763 = vmul.f32 %v747, %v747
    %v764 = vmul.f32 %v748, %v748
    %v765 = vmul.f32 %v749, %v749
    %v766 = vmul.f32 %v750, %v750
    %v767 = vmul.f32 %v751, %v751
    %v768 = vmul.f32 %v752, %v752
    %v769 = vmul.f32 %v753, %v753
    %v770 = vmul.f32 %v754, %v754
    %v771 = vmul.f32 %v755, %v755
    %v772 = vmul.f32 %v756, %v756
    %v773 = vmul.f32 %v757, %v757
    %v774 = vsel %vm41, %v758, 0.0
    %v775 = vsel %vm41, %v759, 0.0
    %v776 = vadd.f32 %v774, %v775
    %v777 = vsel %vm41, %v760, 0.0
    %v778 = vadd.f32 %v776, %v777
    %v779 = vsel %vm41, %v761, 0.0
    %v780 = vadd.f32 %v778, %v779
    %v781 = vsel %vm41, %v762, 0.0
    %v782 = vadd.f32 %v780, %v781
    %v783 = vsel %vm41, %v763, 0.0
    %v784 = vadd.f32 %v782, %v783
    %v785 = vsel %vm41, %v764, 0.0
    %v786 = vadd.f32 %v784, %v785
    %v787 = vsel %vm41, %v765, 0.0
    %v788 = vadd.f32 %v786, %v787
    %v789 = vsel %vm41, %v766, 0.0
    %v790 = vadd.f32 %v788, %v789
    %v791 = vsel %vm41, %v767, 0.0
    %v792 = vadd.f32 %v790, %v791
    %v793 = vsel %vm41, %v768, 0.0
    %v794 = vadd.f32 %v792, %v793
    %v795 = vsel %vm41, %v769, 0.0
    %v796 = vadd.f32 %v794, %v795
    %v797 = vsel %vm41, %v770, 0.0
    %v798 = vadd.f32 %v796, %v797
    %v799 = vsel %vm41, %v771, 0.0
    %v800 = vadd.f32 %v798, %v799
    %v801 = vsel %vm41, %v772, 0.0
    %v802 = vadd.f32 %v800, %v801
    %v803 = vsel %vm41, %v773, 0.0
    %v804 = vadd.f32 %v802, %v803
    %805 = vadd.xlane.f32.xlu0 %v804
    %v806 = vpop.xlane.xlu0 %805
    %v807 = vrot.slane %v806, 4
    %v808 = vadd.f32 %v806, %v807
    %v809 = vrot.slane %v808, 2
    %v810 = vadd.f32 %v808, %v809
    %v811 = vrot.slane %v810, 1
    %v812 = vadd.f32 %v810, %v811
    %s813 = vtos %v812
    %v814 = vstv %s813
    %vm815 = vcmask 0
    %816 = vst.msk [vmem:[#allocation2] sm:$0x1] %vm815, %v814
    // Predicated region
    $region18: #{tpu_custom_call.1} parent=1 // pred_check
      _
    $region19: #{tpu_custom_call.1} parent=1 // pred_check_branch
      %818 = sbr.rel (0) target = $region21
    $region20: #{tpu_custom_call.1} parent=1 // pred_region
      _
    $region21: #{tpu_custom_call.1} parent=1 // pred_fallthru
      _
    // Predicated region
    $region22: #{tpu_custom_call.1} parent=1 // pred_check
      _
    $region23: #{tpu_custom_call.1} parent=1 // pred_check_branch
      %820 = sbr.rel (0) target = $region25
    $region24: #{tpu_custom_call.1} parent=1 // pred_region
      _
    $region25: #{tpu_custom_call.1} parent=1 // pred_fallthru
      _
    // Predicated region
    $region26: #{tpu_custom_call.1} parent=1 // pred_check
      _
    $region27: #{tpu_custom_call.1} parent=1 // pred_check_branch
      %822 = sbr.rel (0) target = $region29
    $region28: #{tpu_custom_call.1} parent=1 // pred_region
      %824 = vsyncadd [#allocation3], 0
      %s826 = sshll.u32 [#allocation2], 4
      %s827 = int_to_ptr.vmem [resolvable:$true] %s826
      %s828 = sshll.u32 %s6, 4
      %s829 = int_to_ptr.hbm [resolvable:$true] %s828
      %831 = dma.vmem_to_hbm [thread:$0]  %s827, 16, %s829, [#allocation3]
    $region29: #{tpu_custom_call.1} parent=1 // pred_fallthru
      _
    // Predicated region
    $region30: #{tpu_custom_call.1} parent=1 // pred_check
      _
    $region31: #{tpu_custom_call.1} parent=1 // pred_check_branch
      %833 = sbr.rel (0) target = $region33
    $region32: #{tpu_custom_call.1} parent=1 // pred_region
      _
    $region33: #{tpu_custom_call.1} parent=1 // pred_fallthru
      _
    // Predicated region
    $region34: #{tpu_custom_call.1} parent=1 // pred_check
      _
    $region35: #{tpu_custom_call.1} parent=1 // pred_check_branch
      %835 = sbr.rel (0) target = $region37
    $region36: #{tpu_custom_call.1} parent=1 // pred_region
      _
    $region37: #{tpu_custom_call.1} parent=1 // pred_fallthru
      _
    // Predicated region
    $region38: #{tpu_custom_call.1} parent=1 // pred_check
      _
    $region39: #{tpu_custom_call.1} parent=1 // pred_check_branch
      %837 = sbr.rel (0) target = $region41
    $region40: #{tpu_custom_call.1} parent=1 // pred_region
      %839 = dma.done [#allocation3], 16
    $region41: #{tpu_custom_call.1} parent=1 // pred_fallthru
      _
    %840 = vsyncpa [#allocation3], 1

</llo_original>
